<compile_context>
chip_gen: v5e
topology: v5e:2x2
jax: 0.10.0
libtpu: 0.0.40
codegen_flags: <defaults>
</compile_context>

<pallas_src>
import jax
import jax.numpy as jnp
from jax.experimental import pallas as pl
from jax.experimental.pallas import tpu as pltpu

HIDDEN = 256
LN_EPS = 1e-5  # PyTorch nn.LayerNorm default

# ---- packed layout for all small (1, n) parameter rows (single f32 DMA) ---------
_PACK_SEGMENTS = (
    ("b0", 3 * HIDDEN),      # fused LSTM layer-0 bias (b_ih + b_hh), i|g|o only
    ("b1", 3 * HIDDEN),      # fused LSTM layer-1 bias, i|g|o only
    ("fb1", 512), ("fg1", 512), ("fbe1", 512),
    ("fb2", 256), ("fg2", 256), ("fbe2", 256),
    ("vb1", 128), ("vg1", 128), ("vbe1", 128),
    ("vw2", 128),            # final 128->1 weight as a lane row (VPU reduce)
    ("vb2", 128),            # final scalar bias broadcast across 128 lanes
)
_PACK_OFF = {}
_off = 0
for _name, _size in _PACK_SEGMENTS:
    _PACK_OFF[_name] = (_off, _size)
    _off += _size
PACK_TOTAL = _off  # 4480 = 35 * 128; every offset is 128-lane aligned

# ---- consolidated K=256 bf16 weight buffer (single DMA, lane-aligned slices) -----
_WK_SEGMENTS = (
    ("wih1", 3 * HIDDEN),    # LSTM layer-1 W_ih^T, i|g|o columns  (256, 768)
    ("fw1", 512),            # feature Linear 256->512             (256, 512)
    ("vw1", 128),            # value Linear 256->128               (256, 128)
)
_WK_OFF = {}
_off = 0
for _name, _size in _WK_SEGMENTS:
    _WK_OFF[_name] = (_off, _size)
    _off += _size
WK_TOTAL = _off  # 1408 = 11 * 128


def _seg(vec_ref, name):
    # point-of-use load of one 128-lane-aligned segment of the packed param row
    off, size = _PACK_OFF[name]
    return vec_ref[:, off:off + size]


def _wk(wk_ref, name):
    # point-of-use load of one 128-lane-aligned slab of the consolidated K=256 buffer
    off, size = _WK_OFF[name]
    return wk_ref[:, off:off + size]


def _layer_norm(x, gamma, beta):
    # single-pass statistics: E[x], E[x^2] -> var = E[x^2] - mu^2 (biased, as PyTorch)
    mu = jnp.mean(x, axis=-1, keepdims=True)
    ex2 = jnp.mean(x * x, axis=-1, keepdims=True)
    var = ex2 - mu * mu
    return (x - mu) * jax.lax.rsqrt(var + LN_EPS) * gamma + beta


def _lstm_cell_zero_state(x_bf16, wih_igo_t, b_igo):
    # hidden=None (first call) -> h0 = c0 = 0: the h @ W_hh term and the forget-gate
    # contribution f * c0 vanish, so only the i|g|o columns of W_ih are computed.
    gates = jnp.dot(x_bf16, wih_igo_t, preferred_element_type=jnp.float32) + b_igo
    i = jax.nn.sigmoid(gates[:, 0 * HIDDEN:1 * HIDDEN])
    g = jnp.tanh(gates[:, 1 * HIDDEN:2 * HIDDEN])
    o = jax.nn.sigmoid(gates[:, 2 * HIDDEN:3 * HIDDEN])
    return o * jnp.tanh(i * g)        # c_new = i * g


def value_net_kernel(x_ref, wih0_ref, fw2_ref, wk_ref, vec_ref, out_ref):
    # --- 2-layer LSTM, seq_len == 1, zero initial state ---
    h1 = _lstm_cell_zero_state(x_ref[...], wih0_ref[...], _seg(vec_ref, "b0"))
    h2 = _lstm_cell_zero_state(h1.astype(jnp.bfloat16), _wk(wk_ref, "wih1"),
                               _seg(vec_ref, "b1"))

    # --- feature_net: Linear->LN->ReLU->Linear->LN->ReLU ---
    z = jnp.dot(h2.astype(jnp.bfloat16), _wk(wk_ref, "fw1"),
                preferred_element_type=jnp.float32) + _seg(vec_ref, "fb1")
    z = jax.nn.relu(_layer_norm(z, _seg(vec_ref, "fg1"), _seg(vec_ref, "fbe1")))
    z = jnp.dot(z.astype(jnp.bfloat16), fw2_ref[...],
                preferred_element_type=jnp.float32) + _seg(vec_ref, "fb2")
    z = jax.nn.relu(_layer_norm(z, _seg(vec_ref, "fg2"), _seg(vec_ref, "fbe2")))

    # --- value_net: Linear->LN->ReLU->Linear(128->1) ---
    v = jnp.dot(z.astype(jnp.bfloat16), _wk(wk_ref, "vw1"),
                preferred_element_type=jnp.float32) + _seg(vec_ref, "vb1")
    v = jax.nn.relu(_layer_norm(v, _seg(vec_ref, "vg1"), _seg(vec_ref, "vbe1")))

    # final 128 -> 1 projection on VPU + XLU lane reduce (N=1 MXU matmul wastes a pass)
    s = jnp.sum(v * _seg(vec_ref, "vw2"), axis=-1, keepdims=True)     # (B_pad, 1)
    # lane-dense output slab: (B_pad, 1) + (1, 128) broadcast -> (B_pad, 128)
    out_ref[...] = (s + _seg(vec_ref, "vb2")).astype(out_ref.dtype)


@jax.jit
def value_net_forward(x, params):
    """x: (B, state_size) float32 -> value: (B, 1) float32 (hidden=None path)."""
    B, S = x.shape
    B_pad = max(16, ((B + 15) // 16) * 16)   # full bf16 sublane tile; no masked stores
    x_p = jnp.pad(x.astype(jnp.bfloat16), ((0, B_pad - B), (0, 0)))

    args = (
        x_p,
        params["wih0_t"],      # (S, 768)      bf16
        params["fw2_t"],       # (512, 256)    bf16
        params["wk256"],       # (256, 1408)   bf16  (wih1 | fw1 | vw1)
        params["packed"],      # (1, 4480)     f32
    )

    weight_elems = (S * 3 * HIDDEN + HIDDEN * 3 * HIDDEN
                    + 256 * 512 + 512 * 256 + 256 * 128)
    cost = pl.CostEstimate(
        flops=2 * B_pad * weight_elems + 2 * B_pad * 128,
        transcendentals=B_pad * (2 * 4 * HIDDEN + 3),
        bytes_accessed=(2 * weight_elems + 4 * PACK_TOTAL
                        + 2 * B_pad * S + 4 * B_pad * 128),
    )

    vmem = pl.BlockSpec(memory_space=pltpu.MemorySpace.VMEM)
    out = pl.pallas_call(
        value_net_kernel,
        out_shape=jax.ShapeDtypeStruct((B_pad, 128), jnp.float32),
        in_specs=[vmem] * len(args),
        out_specs=vmem,
        cost_estimate=cost,
    )(*args)
    return out[:B, :1]


def init_params(key, state_size):
    """Deterministic parameter init mirroring the PyTorch module __init__."""
    keys = jax.random.split(key, 8)
    ortho = jax.nn.initializers.orthogonal(1.414)   # nn.init.orthogonal_(gain=1.414)
    k_lstm = 1.0 / jnp.sqrt(HIDDEN)                 # PyTorch LSTM default U(-1/sqrt(H), 1/sqrt(H))
    # PyTorch gate order is i|f|g|o; keep i, g, o rows (forget gate dead when c0=0)
    igo_rows = jnp.concatenate(
        [jnp.arange(HIDDEN), jnp.arange(2 * HIDDEN, 4 * HIDDEN)])

    def lstm_layer(k, in_dim):
        k1, k2, k3, k4 = jax.random.split(k, 4)
        w_ih = jax.random.uniform(k1, (4 * HIDDEN, in_dim), jnp.float32, -k_lstm, k_lstm)
        # W_hh exists in the PyTorch module but multiplies the (zero) initial hidden
        # state on the hidden=None path, so it never reaches the kernel.
        _ = jax.random.uniform(k2, (4 * HIDDEN, HIDDEN), jnp.float32, -k_lstm, k_lstm)
        b_ih = jax.random.uniform(k3, (4 * HIDDEN,), jnp.float32, -k_lstm, k_lstm)
        b_hh = jax.random.uniform(k4, (4 * HIDDEN,), jnp.float32, -k_lstm, k_lstm)
        w_igo = w_ih[igo_rows]                       # (3H, in_dim)
        b_igo = (b_ih + b_hh)[igo_rows]              # (3H,)
        # kernel consumes W_ih^T (in, 3H) in bf16 and the fused f32 bias
        return w_igo.T.astype(jnp.bfloat16), b_igo[None, :]

    def linear(k, in_dim, out_dim):
        w = ortho(k, (out_dim, in_dim), jnp.float32)   # PyTorch (out, in) layout
        return w.T.astype(jnp.bfloat16), jnp.zeros((1, out_dim), jnp.float32)

    wih0_t, b0 = lstm_layer(keys[0], state_size)
    wih1_t, b1 = lstm_layer(keys[1], HIDDEN)

    fw1_t, fb1 = linear(keys[2], 256, 512)
    fw2_t, fb2 = linear(keys[3], 512, 256)
    vw1_t, vb1 = linear(keys[4], 256, 128)

    vw2_row = ortho(keys[5], (1, 128), jnp.float32)    # final (out=1, in=128) weight row
    vb2 = jnp.zeros((1, 1), jnp.float32)               # bias.data.zero_()

    ln = lambda n: (jnp.ones((1, n), jnp.float32), jnp.zeros((1, n), jnp.float32))
    fg1, fbe1 = ln(512)
    fg2, fbe2 = ln(256)
    vg1, vbe1 = ln(128)

    packed = jnp.concatenate(
        [b0, b1,
         fb1, fg1, fbe1,
         fb2, fg2, fbe2,
         vb1, vg1, vbe1,
         vw2_row, jnp.broadcast_to(vb2, (1, 128))],
        axis=-1,
    )
    assert packed.shape == (1, PACK_TOTAL)

    # one contiguous bf16 buffer for all K=256 matmul weights -> one DMA
    wk256 = jnp.concatenate([wih1_t, fw1_t, vw1_t], axis=-1)
    assert wk256.shape == (HIDDEN, WK_TOTAL) and wk256.dtype == jnp.bfloat16

    return dict(
        wih0_t=wih0_t, fw2_t=fw2_t, wk256=wk256, packed=packed,
    )


if __name__ == "__main__":
    BATCH = 2
    STATE_SIZE = 32

    key = jax.random.PRNGKey(0)
    k_param, k_x = jax.random.split(key)
    params = init_params(k_param, STATE_SIZE)
    x = jax.random.normal(k_x, (BATCH, STATE_SIZE), jnp.float32)

    value = value_net_forward(x, params)
    jax.block_until_ready(value)
    assert value.shape == (BATCH, 1) and value.dtype == jnp.float32
    assert bool(jnp.all(jnp.isfinite(value)))
    print("KERNEL_OK")
</pallas_src>

<mosaic_0001>
module attributes {stable_mosaic.version = 11 : i64} {
  func.func @value_net_kernel(%arg0: memref<16x32xbf16, #tpu.memory_space<vmem>>, %arg1: memref<32x768xbf16, #tpu.memory_space<vmem>>, %arg2: memref<512x256xbf16, #tpu.memory_space<vmem>>, %arg3: memref<256x1408xbf16, #tpu.memory_space<vmem>>, %arg4: memref<1x4480xf32, #tpu.memory_space<vmem>>, %arg5: memref<16x128xf32, #tpu.memory_space<vmem>>) attributes {dimension_semantics = [], scalar_prefetch = 0 : i64, scratch_operands = 0 : i64, tpu.core_type = #tpu.core_type<tc>} {
    %c0 = arith.constant 0 : index
    %c0_0 = arith.constant 0 : index
    %0 = vector.load %arg0[%c0, %c0_0] : memref<16x32xbf16, #tpu.memory_space<vmem>>, vector<16x32xbf16>
    %c0_1 = arith.constant 0 : index
    %c0_2 = arith.constant 0 : index
    %1 = vector.load %arg1[%c0_1, %c0_2] : memref<32x768xbf16, #tpu.memory_space<vmem>>, vector<32x768xbf16>
    %c0_3 = arith.constant 0 : index
    %c0_4 = arith.constant 0 : index
    %2 = vector.load %arg4[%c0_3, %c0_4] : memref<1x4480xf32, #tpu.memory_space<vmem>>, vector<1x768xf32>
    %cst = arith.constant dense<0.000000e+00> : vector<16x768xf32>
    %3 = tpu.matmul %0, %1, %cst {dimension_numbers = #tpu.dot_dimension_numbers<[1], [0], [0], [1], [0, 0, 1, 1], [], []>} : vector<16x32xbf16>, vector<32x768xbf16>, vector<16x768xf32> -> vector<16x768xf32>
    %4 = vector.broadcast %2 : vector<1x768xf32> to vector<16x768xf32>
    %5 = arith.addf %3, %4 : vector<16x768xf32>
    %6 = vector.extract_strided_slice %5 {offsets = [0, 0], sizes = [16, 256], strides = [1, 1]} : vector<16x768xf32> to vector<16x256xf32>
    %7 = arith.negf %6 : vector<16x256xf32>
    %8 = math.exp %7 : vector<16x256xf32>
    %cst_5 = arith.constant 1.000000e+00 : f32
    %9 = vector.broadcast %cst_5 : f32 to vector<16x256xf32>
    %10 = arith.addf %9, %8 : vector<16x256xf32>
    %11 = arith.divf %9, %10 : vector<16x256xf32>
    %12 = vector.extract_strided_slice %5 {offsets = [0, 256], sizes = [16, 256], strides = [1, 1]} : vector<16x768xf32> to vector<16x256xf32>
    %13 = math.tanh %12 : vector<16x256xf32>
    %14 = vector.extract_strided_slice %5 {offsets = [0, 512], sizes = [16, 256], strides = [1, 1]} : vector<16x768xf32> to vector<16x256xf32>
    %15 = arith.negf %14 : vector<16x256xf32>
    %16 = math.exp %15 : vector<16x256xf32>
    %cst_6 = arith.constant 1.000000e+00 : f32
    %17 = vector.broadcast %cst_6 : f32 to vector<16x256xf32>
    %18 = arith.addf %17, %16 : vector<16x256xf32>
    %19 = arith.divf %17, %18 : vector<16x256xf32>
    %20 = arith.mulf %11, %13 : vector<16x256xf32>
    %21 = math.tanh %20 : vector<16x256xf32>
    %22 = arith.mulf %19, %21 : vector<16x256xf32>
    %23 = arith.truncf %22 : vector<16x256xf32> to vector<16x256xbf16>
    %c0_7 = arith.constant 0 : index
    %c0_8 = arith.constant 0 : index
    %24 = vector.load %arg3[%c0_7, %c0_8] : memref<256x1408xbf16, #tpu.memory_space<vmem>>, vector<256x768xbf16>
    %c0_9 = arith.constant 0 : index
    %c768 = arith.constant 768 : index
    %25 = vector.load %arg4[%c0_9, %c768] : memref<1x4480xf32, #tpu.memory_space<vmem>>, vector<1x768xf32>
    %cst_10 = arith.constant dense<0.000000e+00> : vector<16x768xf32>
    %26 = tpu.matmul %23, %24, %cst_10 {dimension_numbers = #tpu.dot_dimension_numbers<[1], [0], [0], [1], [0, 0, 1, 1], [], []>} : vector<16x256xbf16>, vector<256x768xbf16>, vector<16x768xf32> -> vector<16x768xf32>
    %27 = vector.broadcast %25 : vector<1x768xf32> to vector<16x768xf32>
    %28 = arith.addf %26, %27 : vector<16x768xf32>
    %29 = vector.extract_strided_slice %28 {offsets = [0, 0], sizes = [16, 256], strides = [1, 1]} : vector<16x768xf32> to vector<16x256xf32>
    %30 = arith.negf %29 : vector<16x256xf32>
    %31 = math.exp %30 : vector<16x256xf32>
    %cst_11 = arith.constant 1.000000e+00 : f32
    %32 = vector.broadcast %cst_11 : f32 to vector<16x256xf32>
    %33 = arith.addf %32, %31 : vector<16x256xf32>
    %34 = arith.divf %32, %33 : vector<16x256xf32>
    %35 = vector.extract_strided_slice %28 {offsets = [0, 256], sizes = [16, 256], strides = [1, 1]} : vector<16x768xf32> to vector<16x256xf32>
    %36 = math.tanh %35 : vector<16x256xf32>
    %37 = vector.extract_strided_slice %28 {offsets = [0, 512], sizes = [16, 256], strides = [1, 1]} : vector<16x768xf32> to vector<16x256xf32>
    %38 = arith.negf %37 : vector<16x256xf32>
    %39 = math.exp %38 : vector<16x256xf32>
    %cst_12 = arith.constant 1.000000e+00 : f32
    %40 = vector.broadcast %cst_12 : f32 to vector<16x256xf32>
    %41 = arith.addf %40, %39 : vector<16x256xf32>
    %42 = arith.divf %40, %41 : vector<16x256xf32>
    %43 = arith.mulf %34, %36 : vector<16x256xf32>
    %44 = math.tanh %43 : vector<16x256xf32>
    %45 = arith.mulf %42, %44 : vector<16x256xf32>
    %46 = arith.truncf %45 : vector<16x256xf32> to vector<16x256xbf16>
    %c0_13 = arith.constant 0 : index
    %c768_14 = arith.constant 768 : index
    %47 = vector.load %arg3[%c0_13, %c768_14] : memref<256x1408xbf16, #tpu.memory_space<vmem>>, vector<256x512xbf16>
    %cst_15 = arith.constant dense<0.000000e+00> : vector<16x512xf32>
    %48 = tpu.matmul %46, %47, %cst_15 {dimension_numbers = #tpu.dot_dimension_numbers<[1], [0], [0], [1], [0, 0, 1, 1], [], []>} : vector<16x256xbf16>, vector<256x512xbf16>, vector<16x512xf32> -> vector<16x512xf32>
    %c0_16 = arith.constant 0 : index
    %c1536 = arith.constant 1536 : index
    %49 = vector.load %arg4[%c0_16, %c1536] : memref<1x4480xf32, #tpu.memory_space<vmem>>, vector<1x512xf32>
    %50 = vector.broadcast %49 : vector<1x512xf32> to vector<16x512xf32>
    %51 = arith.addf %48, %50 : vector<16x512xf32>
    %c0_17 = arith.constant 0 : index
    %c2048 = arith.constant 2048 : index
    %52 = vector.load %arg4[%c0_17, %c2048] : memref<1x4480xf32, #tpu.memory_space<vmem>>, vector<1x512xf32>
    %c0_18 = arith.constant 0 : index
    %c2560 = arith.constant 2560 : index
    %53 = vector.load %arg4[%c0_18, %c2560] : memref<1x4480xf32, #tpu.memory_space<vmem>>, vector<1x512xf32>
    %cst_19 = arith.constant dense<0.000000e+00> : vector<16xf32>
    %54 = vector.multi_reduction <add>, %51, %cst_19 [1] : vector<16x512xf32> to vector<16xf32>
    %55 = vector.shape_cast %54 : vector<16xf32> to vector<16x1xf32>
    %cst_20 = arith.constant 5.120000e+02 : f32
    %56 = vector.broadcast %cst_20 : f32 to vector<16x1xf32>
    %57 = arith.divf %55, %56 : vector<16x1xf32>
    %58 = arith.mulf %51, %51 : vector<16x512xf32>
    %cst_21 = arith.constant dense<0.000000e+00> : vector<16xf32>
    %59 = vector.multi_reduction <add>, %58, %cst_21 [1] : vector<16x512xf32> to vector<16xf32>
    %60 = vector.shape_cast %59 : vector<16xf32> to vector<16x1xf32>
    %cst_22 = arith.constant 5.120000e+02 : f32
    %61 = vector.broadcast %cst_22 : f32 to vector<16x1xf32>
    %62 = arith.divf %60, %61 : vector<16x1xf32>
    %63 = arith.mulf %57, %57 : vector<16x1xf32>
    %64 = arith.subf %62, %63 : vector<16x1xf32>
    %65 = vector.broadcast %57 : vector<16x1xf32> to vector<16x512xf32>
    %66 = arith.subf %51, %65 : vector<16x512xf32>
    %cst_23 = arith.constant 9.99999974E-6 : f32
    %67 = vector.broadcast %cst_23 : f32 to vector<16x1xf32>
    %68 = arith.addf %64, %67 : vector<16x1xf32>
    %69 = math.rsqrt %68 : vector<16x1xf32>
    %70 = vector.broadcast %69 : vector<16x1xf32> to vector<16x512xf32>
    %71 = arith.mulf %66, %70 : vector<16x512xf32>
    %72 = vector.broadcast %52 : vector<1x512xf32> to vector<16x512xf32>
    %73 = arith.mulf %71, %72 : vector<16x512xf32>
    %74 = vector.broadcast %53 : vector<1x512xf32> to vector<16x512xf32>
    %75 = arith.addf %73, %74 : vector<16x512xf32>
    %cst_24 = arith.constant 0.000000e+00 : f32
    %76 = vector.broadcast %cst_24 : f32 to vector<16x512xf32>
    %77 = arith.maximumf %75, %76 : vector<16x512xf32>
    %78 = arith.truncf %77 : vector<16x512xf32> to vector<16x512xbf16>
    %c0_25 = arith.constant 0 : index
    %c0_26 = arith.constant 0 : index
    %79 = vector.load %arg2[%c0_25, %c0_26] : memref<512x256xbf16, #tpu.memory_space<vmem>>, vector<512x256xbf16>
    %cst_27 = arith.constant dense<0.000000e+00> : vector<16x256xf32>
    %80 = tpu.matmul %78, %79, %cst_27 {dimension_numbers = #tpu.dot_dimension_numbers<[1], [0], [0], [1], [0, 0, 1, 1], [], []>} : vector<16x512xbf16>, vector<512x256xbf16>, vector<16x256xf32> -> vector<16x256xf32>
    %c0_28 = arith.constant 0 : index
    %c3072 = arith.constant 3072 : index
    %81 = vector.load %arg4[%c0_28, %c3072] : memref<1x4480xf32, #tpu.memory_space<vmem>>, vector<1x256xf32>
    %82 = vector.broadcast %81 : vector<1x256xf32> to vector<16x256xf32>
    %83 = arith.addf %80, %82 : vector<16x256xf32>
    %c0_29 = arith.constant 0 : index
    %c3328 = arith.constant 3328 : index
    %84 = vector.load %arg4[%c0_29, %c3328] : memref<1x4480xf32, #tpu.memory_space<vmem>>, vector<1x256xf32>
    %c0_30 = arith.constant 0 : index
    %c3584 = arith.constant 3584 : index
    %85 = vector.load %arg4[%c0_30, %c3584] : memref<1x4480xf32, #tpu.memory_space<vmem>>, vector<1x256xf32>
    %cst_31 = arith.constant dense<0.000000e+00> : vector<16xf32>
    %86 = vector.multi_reduction <add>, %83, %cst_31 [1] : vector<16x256xf32> to vector<16xf32>
    %87 = vector.shape_cast %86 : vector<16xf32> to vector<16x1xf32>
    %cst_32 = arith.constant 2.560000e+02 : f32
    %88 = vector.broadcast %cst_32 : f32 to vector<16x1xf32>
    %89 = arith.divf %87, %88 : vector<16x1xf32>
    %90 = arith.mulf %83, %83 : vector<16x256xf32>
    %cst_33 = arith.constant dense<0.000000e+00> : vector<16xf32>
    %91 = vector.multi_reduction <add>, %90, %cst_33 [1] : vector<16x256xf32> to vector<16xf32>
    %92 = vector.shape_cast %91 : vector<16xf32> to vector<16x1xf32>
    %cst_34 = arith.constant 2.560000e+02 : f32
    %93 = vector.broadcast %cst_34 : f32 to vector<16x1xf32>
    %94 = arith.divf %92, %93 : vector<16x1xf32>
    %95 = arith.mulf %89, %89 : vector<16x1xf32>
    %96 = arith.subf %94, %95 : vector<16x1xf32>
    %97 = vector.broadcast %89 : vector<16x1xf32> to vector<16x256xf32>
    %98 = arith.subf %83, %97 : vector<16x256xf32>
    %cst_35 = arith.constant 9.99999974E-6 : f32
    %99 = vector.broadcast %cst_35 : f32 to vector<16x1xf32>
    %100 = arith.addf %96, %99 : vector<16x1xf32>
    %101 = math.rsqrt %100 : vector<16x1xf32>
    %102 = vector.broadcast %101 : vector<16x1xf32> to vector<16x256xf32>
    %103 = arith.mulf %98, %102 : vector<16x256xf32>
    %104 = vector.broadcast %84 : vector<1x256xf32> to vector<16x256xf32>
    %105 = arith.mulf %103, %104 : vector<16x256xf32>
    %106 = vector.broadcast %85 : vector<1x256xf32> to vector<16x256xf32>
    %107 = arith.addf %105, %106 : vector<16x256xf32>
    %cst_36 = arith.constant 0.000000e+00 : f32
    %108 = vector.broadcast %cst_36 : f32 to vector<16x256xf32>
    %109 = arith.maximumf %107, %108 : vector<16x256xf32>
    %110 = arith.truncf %109 : vector<16x256xf32> to vector<16x256xbf16>
    %c0_37 = arith.constant 0 : index
    %c1280 = arith.constant 1280 : index
    %111 = vector.load %arg3[%c0_37, %c1280] : memref<256x1408xbf16, #tpu.memory_space<vmem>>, vector<256x128xbf16>
    %cst_38 = arith.constant dense<0.000000e+00> : vector<16x128xf32>
    %112 = tpu.matmul %110, %111, %cst_38 {dimension_numbers = #tpu.dot_dimension_numbers<[1], [0], [0], [1], [0, 0, 1, 1], [], []>} : vector<16x256xbf16>, vector<256x128xbf16>, vector<16x128xf32> -> vector<16x128xf32>
    %c0_39 = arith.constant 0 : index
    %c3840 = arith.constant 3840 : index
    %113 = vector.load %arg4[%c0_39, %c3840] : memref<1x4480xf32, #tpu.memory_space<vmem>>, vector<1x128xf32>
    %114 = vector.broadcast %113 : vector<1x128xf32> to vector<16x128xf32>
    %115 = arith.addf %112, %114 : vector<16x128xf32>
    %c0_40 = arith.constant 0 : index
    %c3968 = arith.constant 3968 : index
    %116 = vector.load %arg4[%c0_40, %c3968] : memref<1x4480xf32, #tpu.memory_space<vmem>>, vector<1x128xf32>
    %c0_41 = arith.constant 0 : index
    %c4096 = arith.constant 4096 : index
    %117 = vector.load %arg4[%c0_41, %c4096] : memref<1x4480xf32, #tpu.memory_space<vmem>>, vector<1x128xf32>
    %cst_42 = arith.constant dense<0.000000e+00> : vector<16xf32>
    %118 = vector.multi_reduction <add>, %115, %cst_42 [1] : vector<16x128xf32> to vector<16xf32>
    %119 = vector.shape_cast %118 : vector<16xf32> to vector<16x1xf32>
    %cst_43 = arith.constant 1.280000e+02 : f32
    %120 = vector.broadcast %cst_43 : f32 to vector<16x1xf32>
    %121 = arith.divf %119, %120 : vector<16x1xf32>
    %122 = arith.mulf %115, %115 : vector<16x128xf32>
    %cst_44 = arith.constant dense<0.000000e+00> : vector<16xf32>
    %123 = vector.multi_reduction <add>, %122, %cst_44 [1] : vector<16x128xf32> to vector<16xf32>
    %124 = vector.shape_cast %123 : vector<16xf32> to vector<16x1xf32>
    %cst_45 = arith.constant 1.280000e+02 : f32
    %125 = vector.broadcast %cst_45 : f32 to vector<16x1xf32>
    %126 = arith.divf %124, %125 : vector<16x1xf32>
    %127 = arith.mulf %121, %121 : vector<16x1xf32>
    %128 = arith.subf %126, %127 : vector<16x1xf32>
    %129 = vector.broadcast %121 : vector<16x1xf32> to vector<16x128xf32>
    %130 = arith.subf %115, %129 : vector<16x128xf32>
    %cst_46 = arith.constant 9.99999974E-6 : f32
    %131 = vector.broadcast %cst_46 : f32 to vector<16x1xf32>
    %132 = arith.addf %128, %131 : vector<16x1xf32>
    %133 = math.rsqrt %132 : vector<16x1xf32>
    %134 = vector.broadcast %133 : vector<16x1xf32> to vector<16x128xf32>
    %135 = arith.mulf %130, %134 : vector<16x128xf32>
    %136 = vector.broadcast %116 : vector<1x128xf32> to vector<16x128xf32>
    %137 = arith.mulf %135, %136 : vector<16x128xf32>
    %138 = vector.broadcast %117 : vector<1x128xf32> to vector<16x128xf32>
    %139 = arith.addf %137, %138 : vector<16x128xf32>
    %cst_47 = arith.constant 0.000000e+00 : f32
    %140 = vector.broadcast %cst_47 : f32 to vector<16x128xf32>
    %141 = arith.maximumf %139, %140 : vector<16x128xf32>
    %c0_48 = arith.constant 0 : index
    %c4224 = arith.constant 4224 : index
    %142 = vector.load %arg4[%c0_48, %c4224] : memref<1x4480xf32, #tpu.memory_space<vmem>>, vector<1x128xf32>
    %143 = vector.broadcast %142 : vector<1x128xf32> to vector<16x128xf32>
    %144 = arith.mulf %141, %143 : vector<16x128xf32>
    %cst_49 = arith.constant dense<0.000000e+00> : vector<16xf32>
    %145 = vector.multi_reduction <add>, %144, %cst_49 [1] : vector<16x128xf32> to vector<16xf32>
    %146 = vector.shape_cast %145 : vector<16xf32> to vector<16x1xf32>
    %c0_50 = arith.constant 0 : index
    %c4352 = arith.constant 4352 : index
    %147 = vector.load %arg4[%c0_50, %c4352] : memref<1x4480xf32, #tpu.memory_space<vmem>>, vector<1x128xf32>
    %148 = vector.broadcast %146 : vector<16x1xf32> to vector<16x128xf32>
    %149 = vector.broadcast %147 : vector<1x128xf32> to vector<16x128xf32>
    %150 = arith.addf %148, %149 : vector<16x128xf32>
    %c0_51 = arith.constant 0 : index
    %c0_52 = arith.constant 0 : index
    %151 = vector.load %arg5[%c0_51, %c0_52] : memref<16x128xf32, #tpu.memory_space<vmem>>, vector<16x128xf32>
    tpu.vector_store %arg5[%c0_51, %c0_52], %150 {strides = array<i32>} : memref<16x128xf32, #tpu.memory_space<vmem>>, vector<16x128xf32>,
    return
  }
}

</mosaic_0001>

<llo_original>
// kernel: value_net_forward.1
$region0: #{value_net_forward.1}
  #allocation0 [shape = 'u32[]', space=smem, size = 0x4, offset = 0x4, fixed_abs, tag = 'smem constant byte address 0x4 - core index']
  #allocation1 [shape = 'u32[72,128]{1,0:T(1,128)}', space=vmem, size = 0x9000, scoped, tag = 'internal scratch']
  %s0 = inlined_call_operand.vmem [shape: bf16[16,32], index: 0, kind: input, shape index: {}]
  %s1 = inlined_call_operand.hbm [shape: bf16[32,768], index: 1, kind: input, shape index: {}]
  %s2 = inlined_call_operand.hbm [shape: bf16[512,256], index: 2, kind: input, shape index: {}]
  %s3 = inlined_call_operand.hbm [shape: bf16[256,1408], index: 3, kind: input, shape index: {}]
  %s4 = inlined_call_operand.hbm [shape: f32[1,4480], index: 4, kind: input, shape index: {}]
  %s5 = inlined_call_operand.vmem [shape: f32[16,128], index: 5, kind: output, shape index: {}]
  %s6 = sld [smem:[#allocation0]]
  $region46: #{value_net_forward.1} parent=0
    _
  %s8 = ssub.s32 1, %s6
  %s9 = scalar_select 0, %s8, %s6
  $region1: #{value_net_forward.1} parent=0
    #allocation2 [shape = 'u8[49152]{0}', space=vmem, size = 0xc000, scoped, tag = 'input window, operand 1, single buffered']
    #allocation3 [shape = 's32[1]{0}', space=sflag, size = 0x4, scoped, tag = 'scoped memory for value_net_forward.1']
    #allocation4 [shape = 'u8[262144]{0}', space=vmem, size = 0x40000, scoped, tag = 'input window, operand 2, single buffered']
    #allocation5 [shape = 's32[1]{0}', space=sflag, size = 0x4, scoped, tag = 'scoped memory for value_net_forward.1']
    #allocation6 [shape = 'u8[720896]{0}', space=vmem, size = 0xb0000, scoped, tag = 'input window, operand 3, single buffered']
    #allocation7 [shape = 'u8[17920]{0}', space=vmem, size = 0x4800, scoped, tag = 'input window, operand 4, single buffered']
    #allocation8 [shape = 's32[1]{0}', space=sflag, size = 0x4, scoped, tag = 'scoped memory for value_net_forward.1']
    %10 = vsyncpa [#allocation3], 0
    %11 = vsyncpa [#allocation5], 0
    %12 = vsyncpa [#allocation8], 0
    // Predicated region
    $region2: #{value_net_forward.1} parent=1 // pred_check
      _
    $region3: #{value_net_forward.1} parent=1 // pred_check_branch
      %14 = sbr.rel (0) target = $region5
    $region4: #{value_net_forward.1} parent=1 // pred_region
      _
    $region5: #{value_net_forward.1} parent=1 // pred_fallthru
      _
    // Predicated region
    $region6: #{value_net_forward.1} parent=1 // pred_check
      _
    $region7: #{value_net_forward.1} parent=1 // pred_check_branch
      %16 = sbr.rel (0) target = $region9
    $region8: #{value_net_forward.1} parent=1 // pred_region
      %18 = vsyncadd [#allocation3], 0
      %s19 = sshll.u32 %s1, 4
      %s20 = int_to_ptr.hbm [resolvable:$true] %s19
      %s21 = sshll.u32 [#allocation2], 4
      %s22 = int_to_ptr.vmem [resolvable:$true] %s21
      %27 = dma.hbm_to_vmem [thread:$0]  %s20, 1536, %s22, [#allocation3], 384, 384, 24
    $region9: #{value_net_forward.1} parent=1 // pred_fallthru
      _
    // Predicated region
    $region10: #{value_net_forward.1} parent=1 // pred_check
      _
    $region11: #{value_net_forward.1} parent=1 // pred_check_branch
      %29 = sbr.rel (0) target = $region13
    $region12: #{value_net_forward.1} parent=1 // pred_region
      %31 = vsyncadd [#allocation5], 0
      %s32 = sshll.u32 %s2, 4
      %s33 = int_to_ptr.hbm [resolvable:$true] %s32
      %s34 = sshll.u32 [#allocation4], 4
      %s35 = int_to_ptr.vmem [resolvable:$true] %s34
      %40 = dma.hbm_to_vmem [thread:$0]  %s33, 8192, %s35, [#allocation5], 128, 128, 8
    $region13: #{value_net_forward.1} parent=1 // pred_fallthru
      _
    // Predicated region
    $region14: #{value_net_forward.1} parent=1 // pred_check
      _
    $region15: #{value_net_forward.1} parent=1 // pred_check_branch
      %42 = sbr.rel (0) target = $region17
    $region16: #{value_net_forward.1} parent=1 // pred_region
      %44 = vsyncadd [#allocation5], 0
      %s45 = sshll.u32 %s3, 4
      %s46 = int_to_ptr.hbm [resolvable:$true] %s45
      %s47 = sshll.u32 [#allocation6], 4
      %s48 = int_to_ptr.vmem [resolvable:$true] %s47
      %53 = dma.hbm_to_vmem [thread:$0]  %s46, 22528, %s48, [#allocation5], 704, 704, 44
    $region17: #{value_net_forward.1} parent=1 // pred_fallthru
      _
    // Predicated region
    $region18: #{value_net_forward.1} parent=1 // pred_check
      _
    $region19: #{value_net_forward.1} parent=1 // pred_check_branch
      %55 = sbr.rel (0) target = $region21
    $region20: #{value_net_forward.1} parent=1 // pred_region
      %57 = vsyncadd [#allocation8], 0
      %s59 = sshll.u32 %s4, 4
      %s60 = int_to_ptr.hbm [resolvable:$true] %s59
      %s61 = sshll.u32 [#allocation7], 4
      %s62 = int_to_ptr.vmem [resolvable:$true] %s61
      %64 = dma.hbm_to_vmem [thread:$0]  %s60, 560, %s62, [#allocation8]
    $region21: #{value_net_forward.1} parent=1 // pred_fallthru
      _
    // Predicated region
    $region22: #{value_net_forward.1} parent=1 // pred_check
      _
    $region23: #{value_net_forward.1} parent=1 // pred_check_branch
      %66 = sbr.rel (0) target = $region25
    $region24: #{value_net_forward.1} parent=1 // pred_region
      %68 = dma.done [#allocation3], 1536
    $region25: #{value_net_forward.1} parent=1 // pred_fallthru
      _
    // Predicated region
    $region26: #{value_net_forward.1} parent=1 // pred_check
      _
    $region27: #{value_net_forward.1} parent=1 // pred_check_branch
      %70 = sbr.rel (0) target = $region29
    $region28: #{value_net_forward.1} parent=1 // pred_region
      %72 = dma.done [#allocation5], 8192
    $region29: #{value_net_forward.1} parent=1 // pred_fallthru
      _
    // Predicated region
    $region30: #{value_net_forward.1} parent=1 // pred_check
      _
    $region31: #{value_net_forward.1} parent=1 // pred_check_branch
      %74 = sbr.rel (0) target = $region33
    $region32: #{value_net_forward.1} parent=1 // pred_region
      %76 = dma.done [#allocation5], 22528
    $region33: #{value_net_forward.1} parent=1 // pred_fallthru
      _
    // Predicated region
    $region34: #{value_net_forward.1} parent=1 // pred_check
      _
    $region35: #{value_net_forward.1} parent=1 // pred_check_branch
      %78 = sbr.rel (0) target = $region37
    $region36: #{value_net_forward.1} parent=1 // pred_region
      %80 = dma.done [#allocation8], 560
    $region37: #{value_net_forward.1} parent=1 // pred_fallthru
      _
    %v82 = vld [vmem:[%s0] sm:$0xf]
    %v83 = vld [vmem:[%s0 + $0x4] sm:$0xf]
    %v84 = vld [vmem:[#allocation2] sm:$0xff]
    %v85 = vld [vmem:[#allocation2 + $0x8] sm:$0xff]
    %v86 = vld [vmem:[#allocation2 + $0x10] sm:$0xff]
    %v87 = vld [vmem:[#allocation2 + $0x18] sm:$0xff]
    %v88 = vld [vmem:[#allocation2 + $0x20] sm:$0xff]
    %v89 = vld [vmem:[#allocation2 + $0x28] sm:$0xff]
    %v90 = vld [vmem:[#allocation2 + $0x30] sm:$0xff]
    %v91 = vld [vmem:[#allocation2 + $0x38] sm:$0xff]
    %v92 = vld [vmem:[#allocation2 + $0x40] sm:$0xff]
    %v93 = vld [vmem:[#allocation2 + $0x48] sm:$0xff]
    %v94 = vld [vmem:[#allocation2 + $0x50] sm:$0xff]
    %v95 = vld [vmem:[#allocation2 + $0x58] sm:$0xff]
    %v96 = vld [vmem:[#allocation7] sm:$0x3f]
    %v98 = vperm.slane %v96, 0
    %v99 = vperm.slane %v96, 1
    %v100 = vperm.slane %v96, 2
    %v101 = vperm.slane %v96, 3
    %v102 = vperm.slane %v96, 4
    %v103 = vperm.slane %v96, 5
    %v112 = vunpack.c.l.b16 %v82
    %v113 = vunpack.c.l.b16 %v83
    %v114 = vpack.c.b16 %v113, %v112
    %v127 = vunpack.c.l.b16 %v84
    %v128 = vunpack.c.h.b16 %v84
    %v129 = vunpack.c.l.b16 %v85
    %v130 = vunpack.c.h.b16 %v85
    %v131 = vunpack.c.l.b16 %v86
    %v132 = vunpack.c.h.b16 %v86
    %v133 = vunpack.c.l.b16 %v87
    %v134 = vunpack.c.h.b16 %v87
    %v135 = vunpack.c.l.b16 %v88
    %v136 = vunpack.c.h.b16 %v88
    %v137 = vunpack.c.l.b16 %v89
    %v138 = vunpack.c.h.b16 %v89
    %v139 = vunpack.c.l.b16 %v90
    %v140 = vunpack.c.h.b16 %v90
    %v141 = vunpack.c.l.b16 %v91
    %v142 = vunpack.c.h.b16 %v91
    %v143 = vunpack.c.l.b16 %v92
    %v144 = vunpack.c.h.b16 %v92
    %v145 = vunpack.c.l.b16 %v93
    %v146 = vunpack.c.h.b16 %v93
    %v147 = vunpack.c.l.b16 %v94
    %v148 = vunpack.c.h.b16 %v94
    %v149 = vunpack.c.l.b16 %v95
    %v150 = vunpack.c.h.b16 %v95
    %v151 = vpack.c.b16 %v133, %v127
    %v152 = vpack.c.b16 %v134, %v128
    %v153 = vpack.c.b16 %v135, %v129
    %v154 = vpack.c.b16 %v136, %v130
    %v155 = vpack.c.b16 %v137, %v131
    %v156 = vpack.c.b16 %v138, %v132
    %v157 = vpack.c.b16 %v145, %v139
    %v158 = vpack.c.b16 %v146, %v140
    %v159 = vpack.c.b16 %v147, %v141
    %v160 = vpack.c.b16 %v148, %v142
    %v161 = vpack.c.b16 %v149, %v143
    %v162 = vpack.c.b16 %v150, %v144
    %vm175 = vcmask 261120
    %v177 = vsel %vm175, %v114, 0
    %179 = vmatpush.bf16.msra.mxu0 0
    %180 = vmatpush.bf16.msra.mxu0 0
    %181 = vmatpush.bf16.msra.mxu0 0
    %182 = vmatpush.bf16.msra.mxu0 0
    %183 = vmatpush.bf16.msra.mxu0 0
    %184 = vmatpush.bf16.msra.mxu0 0
    %185 = vmatpush.bf16.msra.mxu0 %v157
    %186 = vmatpush.bf16.msra.mxu0 %v151
    %187 = vmatmul.bf16.gmra.mxu0 %v177
    %v188 = vpop.f32.mrf.mxu0
    %v189 = vadd.f32 %v98, %v188
    %v190 = vpop.f32.mrf.mxu0
    %v191 = vadd.f32 %v98, %v190
    %192 = vdwg.mxu0
    %193 = vmatpush.bf16.msra.mxu0 0
    %194 = vmatpush.bf16.msra.mxu0 0
    %195 = vmatpush.bf16.msra.mxu0 0
    %196 = vmatpush.bf16.msra.mxu0 0
    %197 = vmatpush.bf16.msra.mxu0 0
    %198 = vmatpush.bf16.msra.mxu0 0
    %199 = vmatpush.bf16.msra.mxu0 %v158
    %200 = vmatpush.bf16.msra.mxu0 %v152
    %201 = vmatmul.bf16.gmra.mxu0 %v177
    %v202 = vpop.f32.mrf.mxu0
    %v203 = vadd.f32 %v99, %v202
    %v204 = vpop.f32.mrf.mxu0
    %v205 = vadd.f32 %v99, %v204
    %206 = vdwg.mxu0
    %207 = vmatpush.bf16.msra.mxu0 0
    %208 = vmatpush.bf16.msra.mxu0 0
    %209 = vmatpush.bf16.msra.mxu0 0
    %210 = vmatpush.bf16.msra.mxu0 0
    %211 = vmatpush.bf16.msra.mxu0 0
    %212 = vmatpush.bf16.msra.mxu0 0
    %213 = vmatpush.bf16.msra.mxu0 %v159
    %214 = vmatpush.bf16.msra.mxu0 %v153
    %215 = vmatmul.bf16.gmra.mxu0 %v177
    %v216 = vpop.f32.mrf.mxu0
    %v217 = vadd.f32 %v100, %v216
    %v218 = vpop.f32.mrf.mxu0
    %v219 = vadd.f32 %v100, %v218
    %220 = vdwg.mxu0
    %221 = vmatpush.bf16.msra.mxu0 0
    %222 = vmatpush.bf16.msra.mxu0 0
    %223 = vmatpush.bf16.msra.mxu0 0
    %224 = vmatpush.bf16.msra.mxu0 0
    %225 = vmatpush.bf16.msra.mxu0 0
    %226 = vmatpush.bf16.msra.mxu0 0
    %227 = vmatpush.bf16.msra.mxu0 %v160
    %228 = vmatpush.bf16.msra.mxu0 %v154
    %229 = vmatmul.bf16.gmra.mxu0 %v177
    %v230 = vpop.f32.mrf.mxu0
    %v231 = vadd.f32 %v101, %v230
    %v232 = vpop.f32.mrf.mxu0
    %v233 = vadd.f32 %v101, %v232
    %234 = vdwg.mxu0
    %235 = vmatpush.bf16.msra.mxu0 0
    %236 = vmatpush.bf16.msra.mxu0 0
    %237 = vmatpush.bf16.msra.mxu0 0
    %238 = vmatpush.bf16.msra.mxu0 0
    %239 = vmatpush.bf16.msra.mxu0 0
    %240 = vmatpush.bf16.msra.mxu0 0
    %241 = vmatpush.bf16.msra.mxu0 %v161
    %242 = vmatpush.bf16.msra.mxu0 %v155
    %243 = vmatmul.bf16.gmra.mxu0 %v177
    %v244 = vpop.f32.mrf.mxu0
    %v245 = vadd.f32 %v102, %v244
    %v246 = vpop.f32.mrf.mxu0
    %v247 = vadd.f32 %v102, %v246
    %248 = vdwg.mxu0
    %249 = vmatpush.bf16.msra.mxu0 0
    %250 = vmatpush.bf16.msra.mxu0 0
    %251 = vmatpush.bf16.msra.mxu0 0
    %252 = vmatpush.bf16.msra.mxu0 0
    %253 = vmatpush.bf16.msra.mxu0 0
    %254 = vmatpush.bf16.msra.mxu0 0
    %255 = vmatpush.bf16.msra.mxu0 %v162
    %256 = vmatpush.bf16.msra.mxu0 %v156
    %257 = vmatmul.bf16.gmra.mxu0 %v177
    %v258 = vpop.f32.mrf.mxu0
    %v259 = vadd.f32 %v103, %v258
    %v260 = vpop.f32.mrf.mxu0
    %v261 = vadd.f32 %v103, %v260
    %262 = vdwg.mxu0
    %v263 = vxor.u32 %v189, 2147483648
    %v264 = vxor.u32 %v203, 2147483648
    %v265 = vxor.u32 %v191, 2147483648
    %v266 = vxor.u32 %v205, 2147483648
    %v267 = vmul.f32 %v263, 1.442695
    %v268 = vpow.pop %v267
    %v269 = vmul.f32 %v264, 1.442695
    %v270 = vpow.pop %v269
    %v271 = vmul.f32 %v265, 1.442695
    %v272 = vpow.pop %v271
    %v273 = vmul.f32 %v266, 1.442695
    %v274 = vpow.pop %v273
    %v275 = vadd.f32 %v268, 1.0
    %v276 = vadd.f32 %v270, 1.0
    %v277 = vadd.f32 %v272, 1.0
    %v278 = vadd.f32 %v274, 1.0
    %v279 = vrcp.pop %v275
    %v280 = vmul.f32 %v275, %v279
    %v281 = vsub.f32 1.0, %v280
    %v282 = vmul.f32 %v279, %v281
    %v283 = vadd.f32 %v279, %v282
    %vm284 = vweird.f32 %v275
    %vm285 = vweird.f32 %v279
    %vm286 = vmor %vm284, %vm285
    %v287 = vsel %vm286, %v279, %v283
    %v288 = vand.u32 2147483647, %v275
    %vm289 = vcmp.eq.f32.partialorder %v288, 8.507059e+37
    %v290 = vand.u32 %v275, 2147483648
    %v291 = vor.u32 1.1754944e-38, %v290
    %v292 = vsel %vm289, %v291, %v287
    %v293 = vmul.f32 1.0, %v292
    %v294 = vrcp.pop %v276
    %v295 = vmul.f32 %v276, %v294
    %v296 = vsub.f32 1.0, %v295
    %v297 = vmul.f32 %v294, %v296
    %v298 = vadd.f32 %v294, %v297
    %vm299 = vweird.f32 %v276
    %vm300 = vweird.f32 %v294
    %vm301 = vmor %vm299, %vm300
    %v302 = vsel %vm301, %v294, %v298
    %v303 = vand.u32 2147483647, %v276
    %vm304 = vcmp.eq.f32.partialorder %v303, 8.507059e+37
    %v305 = vand.u32 %v276, 2147483648
    %v306 = vor.u32 1.1754944e-38, %v305
    %v307 = vsel %vm304, %v306, %v302
    %v308 = vmul.f32 1.0, %v307
    %v309 = vrcp.pop %v277
    %v310 = vmul.f32 %v277, %v309
    %v311 = vsub.f32 1.0, %v310
    %v312 = vmul.f32 %v309, %v311
    %v313 = vadd.f32 %v309, %v312
    %vm314 = vweird.f32 %v277
    %vm315 = vweird.f32 %v309
    %vm316 = vmor %vm314, %vm315
    %v317 = vsel %vm316, %v309, %v313
    %v318 = vand.u32 2147483647, %v277
    %vm319 = vcmp.eq.f32.partialorder %v318, 8.507059e+37
    %v320 = vand.u32 %v277, 2147483648
    %v321 = vor.u32 1.1754944e-38, %v320
    %v322 = vsel %vm319, %v321, %v317
    %v323 = vmul.f32 1.0, %v322
    %v324 = vrcp.pop %v278
    %v325 = vmul.f32 %v278, %v324
    %v326 = vsub.f32 1.0, %v325
    %v327 = vmul.f32 %v324, %v326
    %v328 = vadd.f32 %v324, %v327
    %vm329 = vweird.f32 %v278
    %vm330 = vweird.f32 %v324
    %vm331 = vmor %vm329, %vm330
    %v332 = vsel %vm331, %v324, %v328
    %v333 = vand.u32 2147483647, %v278
    %vm334 = vcmp.eq.f32.partialorder %v333, 8.507059e+37
    %v335 = vand.u32 %v278, 2147483648
    %v336 = vor.u32 1.1754944e-38, %v335
    %v337 = vsel %vm334, %v336, %v332
    %v338 = vmul.f32 1.0, %v337
    %v339 = vtanh.pop %v217
    %v340 = vtanh.pop %v231
    %v341 = vtanh.pop %v219
    %v342 = vtanh.pop %v233
    %v343 = vxor.u32 %v245, 2147483648
    %v344 = vxor.u32 %v259, 2147483648
    %v345 = vxor.u32 %v247, 2147483648
    %v346 = vxor.u32 %v261, 2147483648
    %v347 = vmul.f32 %v343, 1.442695
    %v348 = vpow.pop %v347
    %v349 = vmul.f32 %v344, 1.442695
    %v350 = vpow.pop %v349
    %v351 = vmul.f32 %v345, 1.442695
    %v352 = vpow.pop %v351
    %v353 = vmul.f32 %v346, 1.442695
    %v354 = vpow.pop %v353
    %v355 = vadd.f32 %v348, 1.0
    %v356 = vadd.f32 %v350, 1.0
    %v357 = vadd.f32 %v352, 1.0
    %v358 = vadd.f32 %v354, 1.0
    %v359 = vrcp.pop %v355
    %v360 = vmul.f32 %v355, %v359
    %v361 = vsub.f32 1.0, %v360
    %v362 = vmul.f32 %v359, %v361
    %v363 = vadd.f32 %v359, %v362
    %vm364 = vweird.f32 %v355
    %vm365 = vweird.f32 %v359
    %vm366 = vmor %vm364, %vm365
    %v367 = vsel %vm366, %v359, %v363
    %v368 = vand.u32 2147483647, %v355
    %vm369 = vcmp.eq.f32.partialorder %v368, 8.507059e+37
    %v370 = vand.u32 %v355, 2147483648
    %v371 = vor.u32 1.1754944e-38, %v370
    %v372 = vsel %vm369, %v371, %v367
    %v373 = vmul.f32 1.0, %v372
    %v374 = vrcp.pop %v356
    %v375 = vmul.f32 %v356, %v374
    %v376 = vsub.f32 1.0, %v375
    %v377 = vmul.f32 %v374, %v376
    %v378 = vadd.f32 %v374, %v377
    %vm379 = vweird.f32 %v356
    %vm380 = vweird.f32 %v374
    %vm381 = vmor %vm379, %vm380
    %v382 = vsel %vm381, %v374, %v378
    %v383 = vand.u32 2147483647, %v356
    %vm384 = vcmp.eq.f32.partialorder %v383, 8.507059e+37
    %v385 = vand.u32 %v356, 2147483648
    %v386 = vor.u32 1.1754944e-38, %v385
    %v387 = vsel %vm384, %v386, %v382
    %v388 = vmul.f32 1.0, %v387
    %v389 = vrcp.pop %v357
    %v390 = vmul.f32 %v357, %v389
    %v391 = vsub.f32 1.0, %v390
    %v392 = vmul.f32 %v389, %v391
    %v393 = vadd.f32 %v389, %v392
    %vm394 = vweird.f32 %v357
    %vm395 = vweird.f32 %v389
    %vm396 = vmor %vm394, %vm395
    %v397 = vsel %vm396, %v389, %v393
    %v398 = vand.u32 2147483647, %v357
    %vm399 = vcmp.eq.f32.partialorder %v398, 8.507059e+37
    %v400 = vand.u32 %v357, 2147483648
    %v401 = vor.u32 1.1754944e-38, %v400
    %v402 = vsel %vm399, %v401, %v397
    %v403 = vmul.f32 1.0, %v402
    %v404 = vrcp.pop %v358
    %v405 = vmul.f32 %v358, %v404
    %v406 = vsub.f32 1.0, %v405
    %v407 = vmul.f32 %v404, %v406
    %v408 = vadd.f32 %v404, %v407
    %vm409 = vweird.f32 %v358
    %vm410 = vweird.f32 %v404
    %vm411 = vmor %vm409, %vm410
    %v412 = vsel %vm411, %v404, %v408
    %v413 = vand.u32 2147483647, %v358
    %vm414 = vcmp.eq.f32.partialorder %v413, 8.507059e+37
    %v415 = vand.u32 %v358, 2147483648
    %v416 = vor.u32 1.1754944e-38, %v415
    %v417 = vsel %vm414, %v416, %v412
    %v418 = vmul.f32 1.0, %v417
    %v419 = vmul.f32 %v293, %v339
    %v420 = vmul.f32 %v308, %v340
    %v421 = vmul.f32 %v323, %v341
    %v422 = vmul.f32 %v338, %v342
    %v423 = vtanh.pop %v419
    %v424 = vtanh.pop %v420
    %v425 = vtanh.pop %v421
    %v426 = vtanh.pop %v422
    %v427 = vmul.f32 %v373, %v423
    %v428 = vmul.f32 %v388, %v424
    %v429 = vmul.f32 %v403, %v425
    %v430 = vmul.f32 %v418, %v426
    %v431 = vpack.c.bf16 %v429, %v427
    %v432 = vpack.c.bf16 %v430, %v428
    %v433 = vld [vmem:[#allocation6] sm:$0xff]
    %v434 = vld [vmem:[#allocation6 + $0x8] sm:$0xff]
    %v435 = vld [vmem:[#allocation6 + $0x10] sm:$0xff]
    %v436 = vld [vmem:[#allocation6 + $0x2c] sm:$0xff]
    %v437 = vld [vmem:[#allocation6 + $0x34] sm:$0xff]
    %v438 = vld [vmem:[#allocation6 + $0x3c] sm:$0xff]
    %v439 = vld [vmem:[#allocation6 + $0x58] sm:$0xff]
    %v440 = vld [vmem:[#allocation6 + $0x60] sm:$0xff]
    %v441 = vld [vmem:[#allocation6 + $0x68] sm:$0xff]
    %v442 = vld [vmem:[#allocation6 + $0x84] sm:$0xff]
    %v443 = vld [vmem:[#allocation6 + $0x8c] sm:$0xff]
    %v444 = vld [vmem:[#allocation6 + $0x94] sm:$0xff]
    %v445 = vld [vmem:[#allocation6 + $0xb0] sm:$0xff]
    %v446 = vld [vmem:[#allocation6 + $0xb8] sm:$0xff]
    %v447 = vld [vmem:[#allocation6 + $0xc0] sm:$0xff]
    %v448 = vld [vmem:[#allocation6 + $0xdc] sm:$0xff]
    %v449 = vld [vmem:[#allocation6 + $0xe4] sm:$0xff]
    %v450 = vld [vmem:[#allocation6 + $0xec] sm:$0xff]
    %v451 = vld [vmem:[#allocation6 + $0x108] sm:$0xff]
    %v452 = vld [vmem:[#allocation6 + $0x110] sm:$0xff]
    %v453 = vld [vmem:[#allocation6 + $0x118] sm:$0xff]
    %v454 = vld [vmem:[#allocation6 + $0x134] sm:$0xff]
    %v455 = vld [vmem:[#allocation6 + $0x13c] sm:$0xff]
    %v456 = vld [vmem:[#allocation6 + $0x144] sm:$0xff]
    %v457 = vld [vmem:[#allocation6 + $0x160] sm:$0xff]
    %v458 = vld [vmem:[#allocation6 + $0x168] sm:$0xff]
    %v459 = vld [vmem:[#allocation6 + $0x170] sm:$0xff]
    %v460 = vld [vmem:[#allocation6 + $0x18c] sm:$0xff]
    %v461 = vld [vmem:[#allocation6 + $0x194] sm:$0xff]
    %v462 = vld [vmem:[#allocation6 + $0x19c] sm:$0xff]
    %v463 = vld [vmem:[#allocation6 + $0x1b8] sm:$0xff]
    %v464 = vld [vmem:[#allocation6 + $0x1c0] sm:$0xff]
    %v465 = vld [vmem:[#allocation6 + $0x1c8] sm:$0xff]
    %v466 = vld [vmem:[#allocation6 + $0x1e4] sm:$0xff]
    %v467 = vld [vmem:[#allocation6 + $0x1ec] sm:$0xff]
    %v468 = vld [vmem:[#allocation6 + $0x1f4] sm:$0xff]
    %v469 = vld [vmem:[#allocation6 + $0x210] sm:$0xff]
    %v470 = vld [vmem:[#allocation6 + $0x218] sm:$0xff]
    %v471 = vld [vmem:[#allocation6 + $0x220] sm:$0xff]
    %v472 = vld [vmem:[#allocation6 + $0x23c] sm:$0xff]
    %v473 = vld [vmem:[#allocation6 + $0x244] sm:$0xff]
    %v474 = vld [vmem:[#allocation6 + $0x24c] sm:$0xff]
    %v475 = vld [vmem:[#allocation6 + $0x268] sm:$0xff]
    %v476 = vld [vmem:[#allocation6 + $0x270] sm:$0xff]
    %v477 = vld [vmem:[#allocation6 + $0x278] sm:$0xff]
    %v478 = vld [vmem:[#allocation6 + $0x294] sm:$0xff]
    %v479 = vld [vmem:[#allocation6 + $0x29c] sm:$0xff]
    %v480 = vld [vmem:[#allocation6 + $0x2a4] sm:$0xff]
    %v481 = vld [vmem:[#allocation6 + $0x2c0] sm:$0xff]
    %v482 = vld [vmem:[#allocation6 + $0x2c8] sm:$0xff]
    %v483 = vld [vmem:[#allocation6 + $0x2d0] sm:$0xff]
    %v484 = vld [vmem:[#allocation6 + $0x2ec] sm:$0xff]
    %v485 = vld [vmem:[#allocation6 + $0x2f4] sm:$0xff]
    %v486 = vld [vmem:[#allocation6 + $0x2fc] sm:$0xff]
    %v487 = vld [vmem:[#allocation6 + $0x318] sm:$0xff]
    %v488 = vld [vmem:[#allocation6 + $0x320] sm:$0xff]
    %v489 = vld [vmem:[#allocation6 + $0x328] sm:$0xff]
    %v490 = vld [vmem:[#allocation6 + $0x344] sm:$0xff]
    %v491 = vld [vmem:[#allocation6 + $0x34c] sm:$0xff]
    %v492 = vld [vmem:[#allocation6 + $0x354] sm:$0xff]
    %v493 = vld [vmem:[#allocation6 + $0x370] sm:$0xff]
    %v494 = vld [vmem:[#allocation6 + $0x378] sm:$0xff]
    %v495 = vld [vmem:[#allocation6 + $0x380] sm:$0xff]
    %v496 = vld [vmem:[#allocation6 + $0x39c] sm:$0xff]
    %v497 = vld [vmem:[#allocation6 + $0x3a4] sm:$0xff]
    %v498 = vld [vmem:[#allocation6 + $0x3ac] sm:$0xff]
    %v499 = vld [vmem:[#allocation6 + $0x3c8] sm:$0xff]
    %v500 = vld [vmem:[#allocation6 + $0x3d0] sm:$0xff]
    %v501 = vld [vmem:[#allocation6 + $0x3d8] sm:$0xff]
    %v502 = vld [vmem:[#allocation6 + $0x3f4] sm:$0xff]
    %v503 = vld [vmem:[#allocation6 + $0x3fc] sm:$0xff]
    %v504 = vld [vmem:[#allocation6 + $0x404] sm:$0xff]
    %v505 = vld [vmem:[#allocation6 + $0x420] sm:$0xff]
    %v506 = vld [vmem:[#allocation6 + $0x428] sm:$0xff]
    %v507 = vld [vmem:[#allocation6 + $0x430] sm:$0xff]
    %v508 = vld [vmem:[#allocation6 + $0x44c] sm:$0xff]
    %v509 = vld [vmem:[#allocation6 + $0x454] sm:$0xff]
    %v510 = vld [vmem:[#allocation6 + $0x45c] sm:$0xff]
    %v511 = vld [vmem:[#allocation6 + $0x478] sm:$0xff]
    %v512 = vld [vmem:[#allocation6 + $0x480] sm:$0xff]
    %v513 = vld [vmem:[#allocation6 + $0x488] sm:$0xff]
    %v514 = vld [vmem:[#allocation6 + $0x4a4] sm:$0xff]
    %v515 = vld [vmem:[#allocation6 + $0x4ac] sm:$0xff]
    %v516 = vld [vmem:[#allocation6 + $0x4b4] sm:$0xff]
    %v517 = vld [vmem:[#allocation6 + $0x4d0] sm:$0xff]
    %v518 = vld [vmem:[#allocation6 + $0x4d8] sm:$0xff]
    %v519 = vld [vmem:[#allocation6 + $0x4e0] sm:$0xff]
    %v520 = vld [vmem:[#allocation6 + $0x4fc] sm:$0xff]
    %v521 = vld [vmem:[#allocation6 + $0x504] sm:$0xff]
    %v522 = vld [vmem:[#allocation6 + $0x50c] sm:$0xff]
    %v523 = vld [vmem:[#allocation6 + $0x528] sm:$0xff]
    %v524 = vld [vmem:[#allocation6 + $0x530] sm:$0xff]
    %v525 = vld [vmem:[#allocation6 + $0x538] sm:$0xff]
    %v526 = vld [vmem:[#allocation6 + $0x554] sm:$0xff]
    %v527 = vld [vmem:[#allocation6 + $0x55c] sm:$0xff]
    %v528 = vld [vmem:[#allocation6 + $0x564] sm:$0xff]
    %v529 = vld [vmem:[#allocation7 + $0x6] sm:$0x3f]
    %v531 = vperm.slane %v529, 0
    %v532 = vperm.slane %v529, 1
    %v533 = vperm.slane %v529, 2
    %v534 = vperm.slane %v529, 3
    %v535 = vperm.slane %v529, 4
    %v536 = vperm.slane %v529, 5
    %v639 = vunpack.c.l.b16 %v433
    %v640 = vunpack.c.h.b16 %v433
    %v641 = vunpack.c.l.b16 %v434
    %v642 = vunpack.c.h.b16 %v434
    %v643 = vunpack.c.l.b16 %v435
    %v644 = vunpack.c.h.b16 %v435
    %v645 = vunpack.c.l.b16 %v436
    %v646 = vunpack.c.h.b16 %v436
    %v647 = vunpack.c.l.b16 %v437
    %v648 = vunpack.c.h.b16 %v437
    %v649 = vunpack.c.l.b16 %v438
    %v650 = vunpack.c.h.b16 %v438
    %v651 = vunpack.c.l.b16 %v439
    %v652 = vunpack.c.h.b16 %v439
    %v653 = vunpack.c.l.b16 %v440
    %v654 = vunpack.c.h.b16 %v440
    %v655 = vunpack.c.l.b16 %v441
    %v656 = vunpack.c.h.b16 %v441
    %v657 = vunpack.c.l.b16 %v442
    %v658 = vunpack.c.h.b16 %v442
    %v659 = vunpack.c.l.b16 %v443
    %v660 = vunpack.c.h.b16 %v443
    %v661 = vunpack.c.l.b16 %v444
    %v662 = vunpack.c.h.b16 %v444
    %v663 = vunpack.c.l.b16 %v445
    %v664 = vunpack.c.h.b16 %v445
    %v665 = vunpack.c.l.b16 %v446
    %v666 = vunpack.c.h.b16 %v446
    %v667 = vunpack.c.l.b16 %v447
    %v668 = vunpack.c.h.b16 %v447
    %v669 = vunpack.c.l.b16 %v448
    %v670 = vunpack.c.h.b16 %v448
    %v671 = vunpack.c.l.b16 %v449
    %v672 = vunpack.c.h.b16 %v449
    %v673 = vunpack.c.l.b16 %v450
    %v674 = vunpack.c.h.b16 %v450
    %v675 = vunpack.c.l.b16 %v451
    %v676 = vunpack.c.h.b16 %v451
    %v677 = vunpack.c.l.b16 %v452
    %v678 = vunpack.c.h.b16 %v452
    %v679 = vunpack.c.l.b16 %v453
    %v680 = vunpack.c.h.b16 %v453
    %v681 = vunpack.c.l.b16 %v454
    %v682 = vunpack.c.h.b16 %v454
    %v683 = vunpack.c.l.b16 %v455
    %v684 = vunpack.c.h.b16 %v455
    %v685 = vunpack.c.l.b16 %v456
    %v686 = vunpack.c.h.b16 %v456
    %v687 = vunpack.c.l.b16 %v457
    %v688 = vunpack.c.h.b16 %v457
    %v689 = vunpack.c.l.b16 %v458
    %v690 = vunpack.c.h.b16 %v458
    %v691 = vunpack.c.l.b16 %v459
    %v692 = vunpack.c.h.b16 %v459
    %v693 = vunpack.c.l.b16 %v460
    %v694 = vunpack.c.h.b16 %v460
    %v695 = vunpack.c.l.b16 %v461
    %v696 = vunpack.c.h.b16 %v461
    %v697 = vunpack.c.l.b16 %v462
    %v698 = vunpack.c.h.b16 %v462
    %v699 = vunpack.c.l.b16 %v463
    %v700 = vunpack.c.h.b16 %v463
    %v701 = vunpack.c.l.b16 %v464
    %v702 = vunpack.c.h.b16 %v464
    %v703 = vunpack.c.l.b16 %v465
    %v704 = vunpack.c.h.b16 %v465
    %v705 = vunpack.c.l.b16 %v466
    %v706 = vunpack.c.h.b16 %v466
    %v707 = vunpack.c.l.b16 %v467
    %v708 = vunpack.c.h.b16 %v467
    %v709 = vunpack.c.l.b16 %v468
    %v710 = vunpack.c.h.b16 %v468
    %v711 = vunpack.c.l.b16 %v469
    %v712 = vunpack.c.h.b16 %v469
    %v713 = vunpack.c.l.b16 %v470
    %v714 = vunpack.c.h.b16 %v470
    %v715 = vunpack.c.l.b16 %v471
    %v716 = vunpack.c.h.b16 %v471
    %v717 = vunpack.c.l.b16 %v472
    %v718 = vunpack.c.h.b16 %v472
    %v719 = vunpack.c.l.b16 %v473
    %v720 = vunpack.c.h.b16 %v473
    %v721 = vunpack.c.l.b16 %v474
    %v722 = vunpack.c.h.b16 %v474
    %v723 = vunpack.c.l.b16 %v475
    %v724 = vunpack.c.h.b16 %v475
    %v725 = vunpack.c.l.b16 %v476
    %v726 = vunpack.c.h.b16 %v476
    %v727 = vunpack.c.l.b16 %v477
    %v728 = vunpack.c.h.b16 %v477
    %v729 = vunpack.c.l.b16 %v478
    %v730 = vunpack.c.h.b16 %v478
    %v731 = vunpack.c.l.b16 %v479
    %v732 = vunpack.c.h.b16 %v479
    %v733 = vunpack.c.l.b16 %v480
    %v734 = vunpack.c.h.b16 %v480
    %v735 = vunpack.c.l.b16 %v481
    %v736 = vunpack.c.h.b16 %v481
    %v737 = vunpack.c.l.b16 %v482
    %v738 = vunpack.c.h.b16 %v482
    %v739 = vunpack.c.l.b16 %v483
    %v740 = vunpack.c.h.b16 %v483
    %v741 = vunpack.c.l.b16 %v484
    %v742 = vunpack.c.h.b16 %v484
    %v743 = vunpack.c.l.b16 %v485
    %v744 = vunpack.c.h.b16 %v485
    %v745 = vunpack.c.l.b16 %v486
    %v746 = vunpack.c.h.b16 %v486
    %v747 = vunpack.c.l.b16 %v487
    %v748 = vunpack.c.h.b16 %v487
    %v749 = vunpack.c.l.b16 %v488
    %v750 = vunpack.c.h.b16 %v488
    %v751 = vunpack.c.l.b16 %v489
    %v752 = vunpack.c.h.b16 %v489
    %v753 = vunpack.c.l.b16 %v490
    %v754 = vunpack.c.h.b16 %v490
    %v755 = vunpack.c.l.b16 %v491
    %v756 = vunpack.c.h.b16 %v491
    %v757 = vunpack.c.l.b16 %v492
    %v758 = vunpack.c.h.b16 %v492
    %v759 = vunpack.c.l.b16 %v493
    %v760 = vunpack.c.h.b16 %v493
    %v761 = vunpack.c.l.b16 %v494
    %v762 = vunpack.c.h.b16 %v494
    %v763 = vunpack.c.l.b16 %v495
    %v764 = vunpack.c.h.b16 %v495
    %v765 = vunpack.c.l.b16 %v496
    %v766 = vunpack.c.h.b16 %v496
    %v767 = vunpack.c.l.b16 %v497
    %v768 = vunpack.c.h.b16 %v497
    %v769 = vunpack.c.l.b16 %v498
    %v770 = vunpack.c.h.b16 %v498
    %v771 = vunpack.c.l.b16 %v499
    %v772 = vunpack.c.h.b16 %v499
    %v773 = vunpack.c.l.b16 %v500
    %v774 = vunpack.c.h.b16 %v500
    %v775 = vunpack.c.l.b16 %v501
    %v776 = vunpack.c.h.b16 %v501
    %v777 = vunpack.c.l.b16 %v502
    %v778 = vunpack.c.h.b16 %v502
    %v779 = vunpack.c.l.b16 %v503
    %v780 = vunpack.c.h.b16 %v503
    %v781 = vunpack.c.l.b16 %v504
    %v782 = vunpack.c.h.b16 %v504
    %v783 = vunpack.c.l.b16 %v505
    %v784 = vunpack.c.h.b16 %v505
    %v785 = vunpack.c.l.b16 %v506
    %v786 = vunpack.c.h.b16 %v506
    %v787 = vunpack.c.l.b16 %v507
    %v788 = vunpack.c.h.b16 %v507
    %v789 = vunpack.c.l.b16 %v508
    %v790 = vunpack.c.h.b16 %v508
    %v791 = vunpack.c.l.b16 %v509
    %v792 = vunpack.c.h.b16 %v509
    %v793 = vunpack.c.l.b16 %v510
    %v794 = vunpack.c.h.b16 %v510
    %v795 = vunpack.c.l.b16 %v511
    %v796 = vunpack.c.h.b16 %v511
    %v797 = vunpack.c.l.b16 %v512
    %v798 = vunpack.c.h.b16 %v512
    %v799 = vunpack.c.l.b16 %v513
    %v800 = vunpack.c.h.b16 %v513
    %v801 = vunpack.c.l.b16 %v514
    %v802 = vunpack.c.h.b16 %v514
    %v803 = vunpack.c.l.b16 %v515
    %v804 = vunpack.c.h.b16 %v515
    %v805 = vunpack.c.l.b16 %v516
    %v806 = vunpack.c.h.b16 %v516
    %v807 = vunpack.c.l.b16 %v517
    %v808 = vunpack.c.h.b16 %v517
    %v809 = vunpack.c.l.b16 %v518
    %v810 = vunpack.c.h.b16 %v518
    %v811 = vunpack.c.l.b16 %v519
    %v812 = vunpack.c.h.b16 %v519
    %v813 = vunpack.c.l.b16 %v520
    %v814 = vunpack.c.h.b16 %v520
    %v815 = vunpack.c.l.b16 %v521
    %v816 = vunpack.c.h.b16 %v521
    %v817 = vunpack.c.l.b16 %v522
    %v818 = vunpack.c.h.b16 %v522
    %v819 = vunpack.c.l.b16 %v523
    %v820 = vunpack.c.h.b16 %v523
    %v821 = vunpack.c.l.b16 %v524
    %v822 = vunpack.c.h.b16 %v524
    %v823 = vunpack.c.l.b16 %v525
    %v824 = vunpack.c.h.b16 %v525
    %v825 = vunpack.c.l.b16 %v526
    %v826 = vunpack.c.h.b16 %v526
    %v827 = vunpack.c.l.b16 %v527
    %v828 = vunpack.c.h.b16 %v527
    %v829 = vunpack.c.l.b16 %v528
    %v830 = vunpack.c.h.b16 %v528
    %v831 = vpack.c.b16 %v645, %v639
    %v832 = vpack.c.b16 %v646, %v640
    %v833 = vpack.c.b16 %v647, %v641
    %v834 = vpack.c.b16 %v648, %v642
    %v835 = vpack.c.b16 %v649, %v643
    %v836 = vpack.c.b16 %v650, %v644
    %v837 = vpack.c.b16 %v657, %v651
    %v838 = vpack.c.b16 %v658, %v652
    %v839 = vpack.c.b16 %v659, %v653
    %v840 = vpack.c.b16 %v660, %v654
    %v841 = vpack.c.b16 %v661, %v655
    %v842 = vpack.c.b16 %v662, %v656
    %v843 = vpack.c.b16 %v669, %v663
    %v844 = vpack.c.b16 %v670, %v664
    %v845 = vpack.c.b16 %v671, %v665
    %v846 = vpack.c.b16 %v672, %v666
    %v847 = vpack.c.b16 %v673, %v667
    %v848 = vpack.c.b16 %v674, %v668
    %v849 = vpack.c.b16 %v681, %v675
    %v850 = vpack.c.b16 %v682, %v676
    %v851 = vpack.c.b16 %v683, %v677
    %v852 = vpack.c.b16 %v684, %v678
    %v853 = vpack.c.b16 %v685, %v679
    %v854 = vpack.c.b16 %v686, %v680
    %v855 = vpack.c.b16 %v693, %v687
    %v856 = vpack.c.b16 %v694, %v688
    %v857 = vpack.c.b16 %v695, %v689
    %v858 = vpack.c.b16 %v696, %v690
    %v859 = vpack.c.b16 %v697, %v691
    %v860 = vpack.c.b16 %v698, %v692
    %v861 = vpack.c.b16 %v705, %v699
    %v862 = vpack.c.b16 %v706, %v700
    %v863 = vpack.c.b16 %v707, %v701
    %v864 = vpack.c.b16 %v708, %v702
    %v865 = vpack.c.b16 %v709, %v703
    %v866 = vpack.c.b16 %v710, %v704
    %v867 = vpack.c.b16 %v717, %v711
    %v868 = vpack.c.b16 %v718, %v712
    %v869 = vpack.c.b16 %v719, %v713
    %v870 = vpack.c.b16 %v720, %v714
    %v871 = vpack.c.b16 %v721, %v715
    %v872 = vpack.c.b16 %v722, %v716
    %v873 = vpack.c.b16 %v729, %v723
    %v874 = vpack.c.b16 %v730, %v724
    %v875 = vpack.c.b16 %v731, %v725
    %v876 = vpack.c.b16 %v732, %v726
    %v877 = vpack.c.b16 %v733, %v727
    %v878 = vpack.c.b16 %v734, %v728
    %v879 = vpack.c.b16 %v741, %v735
    %v880 = vpack.c.b16 %v742, %v736
    %v881 = vpack.c.b16 %v743, %v737
    %v882 = vpack.c.b16 %v744, %v738
    %v883 = vpack.c.b16 %v745, %v739
    %v884 = vpack.c.b16 %v746, %v740
    %v885 = vpack.c.b16 %v753, %v747
    %v886 = vpack.c.b16 %v754, %v748
    %v887 = vpack.c.b16 %v755, %v749
    %v888 = vpack.c.b16 %v756, %v750
    %v889 = vpack.c.b16 %v757, %v751
    %v890 = vpack.c.b16 %v758, %v752
    %v891 = vpack.c.b16 %v765, %v759
    %v892 = vpack.c.b16 %v766, %v760
    %v893 = vpack.c.b16 %v767, %v761
    %v894 = vpack.c.b16 %v768, %v762
    %v895 = vpack.c.b16 %v769, %v763
    %v896 = vpack.c.b16 %v770, %v764
    %v897 = vpack.c.b16 %v777, %v771
    %v898 = vpack.c.b16 %v778, %v772
    %v899 = vpack.c.b16 %v779, %v773
    %v900 = vpack.c.b16 %v780, %v774
    %v901 = vpack.c.b16 %v781, %v775
    %v902 = vpack.c.b16 %v782, %v776
    %v903 = vpack.c.b16 %v789, %v783
    %v904 = vpack.c.b16 %v790, %v784
    %v905 = vpack.c.b16 %v791, %v785
    %v906 = vpack.c.b16 %v792, %v786
    %v907 = vpack.c.b16 %v793, %v787
    %v908 = vpack.c.b16 %v794, %v788
    %v909 = vpack.c.b16 %v801, %v795
    %v910 = vpack.c.b16 %v802, %v796
    %v911 = vpack.c.b16 %v803, %v797
    %v912 = vpack.c.b16 %v804, %v798
    %v913 = vpack.c.b16 %v805, %v799
    %v914 = vpack.c.b16 %v806, %v800
    %v915 = vpack.c.b16 %v813, %v807
    %v916 = vpack.c.b16 %v814, %v808
    %v917 = vpack.c.b16 %v815, %v809
    %v918 = vpack.c.b16 %v816, %v810
    %v919 = vpack.c.b16 %v817, %v811
    %v920 = vpack.c.b16 %v818, %v812
    %v921 = vpack.c.b16 %v825, %v819
    %v922 = vpack.c.b16 %v826, %v820
    %v923 = vpack.c.b16 %v827, %v821
    %v924 = vpack.c.b16 %v828, %v822
    %v925 = vpack.c.b16 %v829, %v823
    %v926 = vpack.c.b16 %v830, %v824
    %1023 = vmatpush.bf16.msra.mxu0 %v873
    %1024 = vmatpush.bf16.msra.mxu0 %v867
    %1025 = vmatpush.bf16.msra.mxu0 %v861
    %1026 = vmatpush.bf16.msra.mxu0 %v855
    %1027 = vmatpush.bf16.msra.mxu0 %v849
    %1028 = vmatpush.bf16.msra.mxu0 %v843
    %1029 = vmatpush.bf16.msra.mxu0 %v837
    %1030 = vmatpush.bf16.msra.mxu0 %v831
    %1031 = vmatmul.bf16.gmra.mxu0 %v431
    %v1032 = vpop.f32.mrf.mxu0
    %v1033 = vadd.f32 %v531, %v1032
    %v1034 = vpop.f32.mrf.mxu0
    %v1035 = vadd.f32 %v531, %v1034
    %1036 = vdwg.mxu0
    %1037 = vmatpush.bf16.msra.mxu0 %v921
    %1038 = vmatpush.bf16.msra.mxu0 %v915
    %1039 = vmatpush.bf16.msra.mxu0 %v909
    %1040 = vmatpush.bf16.msra.mxu0 %v903
    %1041 = vmatpush.bf16.msra.mxu0 %v897
    %1042 = vmatpush.bf16.msra.mxu0 %v891
    %1043 = vmatpush.bf16.msra.mxu0 %v885
    %1044 = vmatpush.bf16.msra.mxu0 %v879
    %1045 = vmatmul.bf16.gmra.mxu0 %v432
    %v1046 = vpop.f32.mrf.mxu0
    %v1047 = vadd.f32 %v1033, %v1046
    %v1048 = vpop.f32.mrf.mxu0
    %v1049 = vadd.f32 %v1035, %v1048
    %1050 = vdwg.mxu0
    %1051 = vmatpush.bf16.msra.mxu0 %v874
    %1052 = vmatpush.bf16.msra.mxu0 %v868
    %1053 = vmatpush.bf16.msra.mxu0 %v862
    %1054 = vmatpush.bf16.msra.mxu0 %v856
    %1055 = vmatpush.bf16.msra.mxu0 %v850
    %1056 = vmatpush.bf16.msra.mxu0 %v844
    %1057 = vmatpush.bf16.msra.mxu0 %v838
    %1058 = vmatpush.bf16.msra.mxu0 %v832
    %1059 = vmatmul.bf16.gmra.mxu0 %v431
    %v1060 = vpop.f32.mrf.mxu0
    %v1061 = vadd.f32 %v532, %v1060
    %v1062 = vpop.f32.mrf.mxu0
    %v1063 = vadd.f32 %v532, %v1062
    %1064 = vdwg.mxu0
    %1065 = vmatpush.bf16.msra.mxu0 %v922
    %1066 = vmatpush.bf16.msra.mxu0 %v916
    %1067 = vmatpush.bf16.msra.mxu0 %v910
    %1068 = vmatpush.bf16.msra.mxu0 %v904
    %1069 = vmatpush.bf16.msra.mxu0 %v898
    %1070 = vmatpush.bf16.msra.mxu0 %v892
    %1071 = vmatpush.bf16.msra.mxu0 %v886
    %1072 = vmatpush.bf16.msra.mxu0 %v880
    %1073 = vmatmul.bf16.gmra.mxu0 %v432
    %v1074 = vpop.f32.mrf.mxu0
    %v1075 = vadd.f32 %v1061, %v1074
    %v1076 = vpop.f32.mrf.mxu0
    %v1077 = vadd.f32 %v1063, %v1076
    %1078 = vdwg.mxu0
    %1079 = vmatpush.bf16.msra.mxu0 %v875
    %1080 = vmatpush.bf16.msra.mxu0 %v869
    %1081 = vmatpush.bf16.msra.mxu0 %v863
    %1082 = vmatpush.bf16.msra.mxu0 %v857
    %1083 = vmatpush.bf16.msra.mxu0 %v851
    %1084 = vmatpush.bf16.msra.mxu0 %v845
    %1085 = vmatpush.bf16.msra.mxu0 %v839
    %1086 = vmatpush.bf16.msra.mxu0 %v833
    %1087 = vmatmul.bf16.gmra.mxu0 %v431
    %v1088 = vpop.f32.mrf.mxu0
    %v1089 = vadd.f32 %v533, %v1088
    %v1090 = vpop.f32.mrf.mxu0
    %v1091 = vadd.f32 %v533, %v1090
    %1092 = vdwg.mxu0
    %1093 = vmatpush.bf16.msra.mxu0 %v923
    %1094 = vmatpush.bf16.msra.mxu0 %v917
    %1095 = vmatpush.bf16.msra.mxu0 %v911
    %1096 = vmatpush.bf16.msra.mxu0 %v905
    %1097 = vmatpush.bf16.msra.mxu0 %v899
    %1098 = vmatpush.bf16.msra.mxu0 %v893
    %1099 = vmatpush.bf16.msra.mxu0 %v887
    %1100 = vmatpush.bf16.msra.mxu0 %v881
    %1101 = vmatmul.bf16.gmra.mxu0 %v432
    %v1102 = vpop.f32.mrf.mxu0
    %v1103 = vadd.f32 %v1089, %v1102
    %v1104 = vpop.f32.mrf.mxu0
    %v1105 = vadd.f32 %v1091, %v1104
    %1106 = vdwg.mxu0
    %1107 = vmatpush.bf16.msra.mxu0 %v876
    %1108 = vmatpush.bf16.msra.mxu0 %v870
    %1109 = vmatpush.bf16.msra.mxu0 %v864
    %1110 = vmatpush.bf16.msra.mxu0 %v858
    %1111 = vmatpush.bf16.msra.mxu0 %v852
    %1112 = vmatpush.bf16.msra.mxu0 %v846
    %1113 = vmatpush.bf16.msra.mxu0 %v840
    %1114 = vmatpush.bf16.msra.mxu0 %v834
    %1115 = vmatmul.bf16.gmra.mxu0 %v431
    %v1116 = vpop.f32.mrf.mxu0
    %v1117 = vadd.f32 %v534, %v1116
    %v1118 = vpop.f32.mrf.mxu0
    %v1119 = vadd.f32 %v534, %v1118
    %1120 = vdwg.mxu0
    %1121 = vmatpush.bf16.msra.mxu0 %v924
    %1122 = vmatpush.bf16.msra.mxu0 %v918
    %1123 = vmatpush.bf16.msra.mxu0 %v912
    %1124 = vmatpush.bf16.msra.mxu0 %v906
    %1125 = vmatpush.bf16.msra.mxu0 %v900
    %1126 = vmatpush.bf16.msra.mxu0 %v894
    %1127 = vmatpush.bf16.msra.mxu0 %v888
    %1128 = vmatpush.bf16.msra.mxu0 %v882
    %1129 = vmatmul.bf16.gmra.mxu0 %v432
    %v1130 = vpop.f32.mrf.mxu0
    %v1131 = vadd.f32 %v1117, %v1130
    %v1132 = vpop.f32.mrf.mxu0
    %v1133 = vadd.f32 %v1119, %v1132
    %1134 = vdwg.mxu0
    %1135 = vmatpush.bf16.msra.mxu0 %v877
    %1136 = vmatpush.bf16.msra.mxu0 %v871
    %1137 = vmatpush.bf16.msra.mxu0 %v865
    %1138 = vmatpush.bf16.msra.mxu0 %v859
    %1139 = vmatpush.bf16.msra.mxu0 %v853
    %1140 = vmatpush.bf16.msra.mxu0 %v847
    %1141 = vmatpush.bf16.msra.mxu0 %v841
    %1142 = vmatpush.bf16.msra.mxu0 %v835
    %1143 = vmatmul.bf16.gmra.mxu0 %v431
    %v1144 = vpop.f32.mrf.mxu0
    %v1145 = vadd.f32 %v535, %v1144
    %v1146 = vpop.f32.mrf.mxu0
    %v1147 = vadd.f32 %v535, %v1146
    %1148 = vdwg.mxu0
    %1149 = vmatpush.bf16.msra.mxu0 %v925
    %1150 = vmatpush.bf16.msra.mxu0 %v919
    %1151 = vmatpush.bf16.msra.mxu0 %v913
    %1152 = vmatpush.bf16.msra.mxu0 %v907
    %1153 = vmatpush.bf16.msra.mxu0 %v901
    %1154 = vmatpush.bf16.msra.mxu0 %v895
    %1155 = vmatpush.bf16.msra.mxu0 %v889
    %1156 = vmatpush.bf16.msra.mxu0 %v883
    %1157 = vmatmul.bf16.gmra.mxu0 %v432
    %v1158 = vpop.f32.mrf.mxu0
    %v1159 = vadd.f32 %v1145, %v1158
    %v1160 = vpop.f32.mrf.mxu0
    %v1161 = vadd.f32 %v1147, %v1160
    %1162 = vdwg.mxu0
    %1163 = vmatpush.bf16.msra.mxu0 %v878
    %1164 = vmatpush.bf16.msra.mxu0 %v872
    %1165 = vmatpush.bf16.msra.mxu0 %v866
    %1166 = vmatpush.bf16.msra.mxu0 %v860
    %1167 = vmatpush.bf16.msra.mxu0 %v854
    %1168 = vmatpush.bf16.msra.mxu0 %v848
    %1169 = vmatpush.bf16.msra.mxu0 %v842
    %1170 = vmatpush.bf16.msra.mxu0 %v836
    %1171 = vmatmul.bf16.gmra.mxu0 %v431
    %v1172 = vpop.f32.mrf.mxu0
    %v1173 = vadd.f32 %v536, %v1172
    %v1174 = vpop.f32.mrf.mxu0
    %v1175 = vadd.f32 %v536, %v1174
    %1176 = vdwg.mxu0
    %1177 = vmatpush.bf16.msra.mxu0 %v926
    %1178 = vmatpush.bf16.msra.mxu0 %v920
    %1179 = vmatpush.bf16.msra.mxu0 %v914
    %1180 = vmatpush.bf16.msra.mxu0 %v908
    %1181 = vmatpush.bf16.msra.mxu0 %v902
    %1182 = vmatpush.bf16.msra.mxu0 %v896
    %1183 = vmatpush.bf16.msra.mxu0 %v890
    %1184 = vmatpush.bf16.msra.mxu0 %v884
    %1185 = vmatmul.bf16.gmra.mxu0 %v432
    %v1186 = vpop.f32.mrf.mxu0
    %v1187 = vadd.f32 %v1173, %v1186
    %v1188 = vpop.f32.mrf.mxu0
    %v1189 = vadd.f32 %v1175, %v1188
    %1190 = vdwg.mxu0
    %v1191 = vxor.u32 %v1047, 2147483648
    %v1192 = vxor.u32 %v1075, 2147483648
    %v1193 = vxor.u32 %v1049, 2147483648
    %v1194 = vxor.u32 %v1077, 2147483648
    %v1195 = vmul.f32 %v1191, 1.442695
    %v1196 = vpow.pop %v1195
    %v1197 = vmul.f32 %v1192, 1.442695
    %v1198 = vpow.pop %v1197
    %v1199 = vmul.f32 %v1193, 1.442695
    %v1200 = vpow.pop %v1199
    %v1201 = vmul.f32 %v1194, 1.442695
    %v1202 = vpow.pop %v1201
    %v1203 = vadd.f32 %v1196, 1.0
    %v1204 = vadd.f32 %v1198, 1.0
    %v1205 = vadd.f32 %v1200, 1.0
    %v1206 = vadd.f32 %v1202, 1.0
    %v1207 = vrcp.pop %v1203
    %v1208 = vmul.f32 %v1203, %v1207
    %v1209 = vsub.f32 1.0, %v1208
    %v1210 = vmul.f32 %v1207, %v1209
    %v1211 = vadd.f32 %v1207, %v1210
    %vm1212 = vweird.f32 %v1203
    %vm1213 = vweird.f32 %v1207
    %vm1214 = vmor %vm1212, %vm1213
    %v1215 = vsel %vm1214, %v1207, %v1211
    %v1216 = vand.u32 2147483647, %v1203
    %vm1217 = vcmp.eq.f32.partialorder %v1216, 8.507059e+37
    %v1218 = vand.u32 %v1203, 2147483648
    %v1219 = vor.u32 1.1754944e-38, %v1218
    %v1220 = vsel %vm1217, %v1219, %v1215
    %v1221 = vmul.f32 1.0, %v1220
    %v1222 = vrcp.pop %v1204
    %v1223 = vmul.f32 %v1204, %v1222
    %v1224 = vsub.f32 1.0, %v1223
    %v1225 = vmul.f32 %v1222, %v1224
    %v1226 = vadd.f32 %v1222, %v1225
    %vm1227 = vweird.f32 %v1204
    %vm1228 = vweird.f32 %v1222
    %vm1229 = vmor %vm1227, %vm1228
    %v1230 = vsel %vm1229, %v1222, %v1226
    %v1231 = vand.u32 2147483647, %v1204
    %vm1232 = vcmp.eq.f32.partialorder %v1231, 8.507059e+37
    %v1233 = vand.u32 %v1204, 2147483648
    %v1234 = vor.u32 1.1754944e-38, %v1233
    %v1235 = vsel %vm1232, %v1234, %v1230
    %v1236 = vmul.f32 1.0, %v1235
    %v1237 = vrcp.pop %v1205
    %v1238 = vmul.f32 %v1205, %v1237
    %v1239 = vsub.f32 1.0, %v1238
    %v1240 = vmul.f32 %v1237, %v1239
    %v1241 = vadd.f32 %v1237, %v1240
    %vm1242 = vweird.f32 %v1205
    %vm1243 = vweird.f32 %v1237
    %vm1244 = vmor %vm1242, %vm1243
    %v1245 = vsel %vm1244, %v1237, %v1241
    %v1246 = vand.u32 2147483647, %v1205
    %vm1247 = vcmp.eq.f32.partialorder %v1246, 8.507059e+37
    %v1248 = vand.u32 %v1205, 2147483648
    %v1249 = vor.u32 1.1754944e-38, %v1248
    %v1250 = vsel %vm1247, %v1249, %v1245
    %v1251 = vmul.f32 1.0, %v1250
    %v1252 = vrcp.pop %v1206
    %v1253 = vmul.f32 %v1206, %v1252
    %v1254 = vsub.f32 1.0, %v1253
    %v1255 = vmul.f32 %v1252, %v1254
    %v1256 = vadd.f32 %v1252, %v1255
    %vm1257 = vweird.f32 %v1206
    %vm1258 = vweird.f32 %v1252
    %vm1259 = vmor %vm1257, %vm1258
    %v1260 = vsel %vm1259, %v1252, %v1256
    %v1261 = vand.u32 2147483647, %v1206
    %vm1262 = vcmp.eq.f32.partialorder %v1261, 8.507059e+37
    %v1263 = vand.u32 %v1206, 2147483648
    %v1264 = vor.u32 1.1754944e-38, %v1263
    %v1265 = vsel %vm1262, %v1264, %v1260
    %v1266 = vmul.f32 1.0, %v1265
    %v1267 = vtanh.pop %v1103
    %v1268 = vtanh.pop %v1131
    %v1269 = vtanh.pop %v1105
    %v1270 = vtanh.pop %v1133
    %v1271 = vxor.u32 %v1159, 2147483648
    %v1272 = vxor.u32 %v1187, 2147483648
    %v1273 = vxor.u32 %v1161, 2147483648
    %v1274 = vxor.u32 %v1189, 2147483648
    %v1275 = vmul.f32 %v1271, 1.442695
    %v1276 = vpow.pop %v1275
    %v1277 = vmul.f32 %v1272, 1.442695
    %v1278 = vpow.pop %v1277
    %v1279 = vmul.f32 %v1273, 1.442695
    %v1280 = vpow.pop %v1279
    %v1281 = vmul.f32 %v1274, 1.442695
    %v1282 = vpow.pop %v1281
    %v1283 = vadd.f32 %v1276, 1.0
    %v1284 = vadd.f32 %v1278, 1.0
    %v1285 = vadd.f32 %v1280, 1.0
    %v1286 = vadd.f32 %v1282, 1.0
    %v1287 = vrcp.pop %v1283
    %v1288 = vmul.f32 %v1283, %v1287
    %v1289 = vsub.f32 1.0, %v1288
    %v1290 = vmul.f32 %v1287, %v1289
    %v1291 = vadd.f32 %v1287, %v1290
    %vm1292 = vweird.f32 %v1283
    %vm1293 = vweird.f32 %v1287
    %vm1294 = vmor %vm1292, %vm1293
    %v1295 = vsel %vm1294, %v1287, %v1291
    %v1296 = vand.u32 2147483647, %v1283
    %vm1297 = vcmp.eq.f32.partialorder %v1296, 8.507059e+37
    %v1298 = vand.u32 %v1283, 2147483648
    %v1299 = vor.u32 1.1754944e-38, %v1298
    %v1300 = vsel %vm1297, %v1299, %v1295
    %v1301 = vmul.f32 1.0, %v1300
    %v1302 = vrcp.pop %v1284
    %v1303 = vmul.f32 %v1284, %v1302
    %v1304 = vsub.f32 1.0, %v1303
    %v1305 = vmul.f32 %v1302, %v1304
    %v1306 = vadd.f32 %v1302, %v1305
    %vm1307 = vweird.f32 %v1284
    %vm1308 = vweird.f32 %v1302
    %vm1309 = vmor %vm1307, %vm1308
    %v1310 = vsel %vm1309, %v1302, %v1306
    %v1311 = vand.u32 2147483647, %v1284
    %vm1312 = vcmp.eq.f32.partialorder %v1311, 8.507059e+37
    %v1313 = vand.u32 %v1284, 2147483648
    %v1314 = vor.u32 1.1754944e-38, %v1313
    %v1315 = vsel %vm1312, %v1314, %v1310
    %v1316 = vmul.f32 1.0, %v1315
    %v1317 = vrcp.pop %v1285
    %v1318 = vmul.f32 %v1285, %v1317
    %v1319 = vsub.f32 1.0, %v1318
    %v1320 = vmul.f32 %v1317, %v1319
    %v1321 = vadd.f32 %v1317, %v1320
    %vm1322 = vweird.f32 %v1285
    %vm1323 = vweird.f32 %v1317
    %vm1324 = vmor %vm1322, %vm1323
    %v1325 = vsel %vm1324, %v1317, %v1321
    %v1326 = vand.u32 2147483647, %v1285
    %vm1327 = vcmp.eq.f32.partialorder %v1326, 8.507059e+37
    %v1328 = vand.u32 %v1285, 2147483648
    %v1329 = vor.u32 1.1754944e-38, %v1328
    %v1330 = vsel %vm1327, %v1329, %v1325
    %v1331 = vmul.f32 1.0, %v1330
    %v1332 = vrcp.pop %v1286
    %v1333 = vmul.f32 %v1286, %v1332
    %v1334 = vsub.f32 1.0, %v1333
    %v1335 = vmul.f32 %v1332, %v1334
    %v1336 = vadd.f32 %v1332, %v1335
    %vm1337 = vweird.f32 %v1286
    %vm1338 = vweird.f32 %v1332
    %vm1339 = vmor %vm1337, %vm1338
    %v1340 = vsel %vm1339, %v1332, %v1336
    %v1341 = vand.u32 2147483647, %v1286
    %vm1342 = vcmp.eq.f32.partialorder %v1341, 8.507059e+37
    %v1343 = vand.u32 %v1286, 2147483648
    %v1344 = vor.u32 1.1754944e-38, %v1343
    %v1345 = vsel %vm1342, %v1344, %v1340
    %v1346 = vmul.f32 1.0, %v1345
    %v1347 = vmul.f32 %v1221, %v1267
    %v1348 = vmul.f32 %v1236, %v1268
    %v1349 = vmul.f32 %v1251, %v1269
    %v1350 = vmul.f32 %v1266, %v1270
    %v1351 = vtanh.pop %v1347
    %v1352 = vtanh.pop %v1348
    %v1353 = vtanh.pop %v1349
    %v1354 = vtanh.pop %v1350
    %v1355 = vmul.f32 %v1301, %v1351
    %v1356 = vmul.f32 %v1316, %v1352
    %v1357 = vmul.f32 %v1331, %v1353
    %v1358 = vmul.f32 %v1346, %v1354
    %v1359 = vpack.c.bf16 %v1357, %v1355
    %v1360 = vpack.c.bf16 %v1358, %v1356
    %v1361 = vld [vmem:[#allocation6 + $0x18] sm:$0xff]
    %v1362 = vld [vmem:[#allocation6 + $0x20] sm:$0xff]
    %v1363 = vld [vmem:[#allocation6 + $0x44] sm:$0xff]
    %v1364 = vld [vmem:[#allocation6 + $0x4c] sm:$0xff]
    %v1365 = vld [vmem:[#allocation6 + $0x70] sm:$0xff]
    %v1366 = vld [vmem:[#allocation6 + $0x78] sm:$0xff]
    %v1367 = vld [vmem:[#allocation6 + $0x9c] sm:$0xff]
    %v1368 = vld [vmem:[#allocation6 + $0xa4] sm:$0xff]
    %v1369 = vld [vmem:[#allocation6 + $0xc8] sm:$0xff]
    %v1370 = vld [vmem:[#allocation6 + $0xd0] sm:$0xff]
    %v1371 = vld [vmem:[#allocation6 + $0xf4] sm:$0xff]
    %v1372 = vld [vmem:[#allocation6 + $0xfc] sm:$0xff]
    %v1373 = vld [vmem:[#allocation6 + $0x120] sm:$0xff]
    %v1374 = vld [vmem:[#allocation6 + $0x128] sm:$0xff]
    %v1375 = vld [vmem:[#allocation6 + $0x14c] sm:$0xff]
    %v1376 = vld [vmem:[#allocation6 + $0x154] sm:$0xff]
    %v1377 = vld [vmem:[#allocation6 + $0x178] sm:$0xff]
    %v1378 = vld [vmem:[#allocation6 + $0x180] sm:$0xff]
    %v1379 = vld [vmem:[#allocation6 + $0x1a4] sm:$0xff]
    %v1380 = vld [vmem:[#allocation6 + $0x1ac] sm:$0xff]
    %v1381 = vld [vmem:[#allocation6 + $0x1d0] sm:$0xff]
    %v1382 = vld [vmem:[#allocation6 + $0x1d8] sm:$0xff]
    %v1383 = vld [vmem:[#allocation6 + $0x1fc] sm:$0xff]
    %v1384 = vld [vmem:[#allocation6 + $0x204] sm:$0xff]
    %v1385 = vld [vmem:[#allocation6 + $0x228] sm:$0xff]
    %v1386 = vld [vmem:[#allocation6 + $0x230] sm:$0xff]
    %v1387 = vld [vmem:[#allocation6 + $0x254] sm:$0xff]
    %v1388 = vld [vmem:[#allocation6 + $0x25c] sm:$0xff]
    %v1389 = vld [vmem:[#allocation6 + $0x280] sm:$0xff]
    %v1390 = vld [vmem:[#allocation6 + $0x288] sm:$0xff]
    %v1391 = vld [vmem:[#allocation6 + $0x2ac] sm:$0xff]
    %v1392 = vld [vmem:[#allocation6 + $0x2b4] sm:$0xff]
    %v1393 = vld [vmem:[#allocation6 + $0x2d8] sm:$0xff]
    %v1394 = vld [vmem:[#allocation6 + $0x2e0] sm:$0xff]
    %v1395 = vld [vmem:[#allocation6 + $0x304] sm:$0xff]
    %v1396 = vld [vmem:[#allocation6 + $0x30c] sm:$0xff]
    %v1397 = vld [vmem:[#allocation6 + $0x330] sm:$0xff]
    %v1398 = vld [vmem:[#allocation6 + $0x338] sm:$0xff]
    %v1399 = vld [vmem:[#allocation6 + $0x35c] sm:$0xff]
    %v1400 = vld [vmem:[#allocation6 + $0x364] sm:$0xff]
    %v1401 = vld [vmem:[#allocation6 + $0x388] sm:$0xff]
    %v1402 = vld [vmem:[#allocation6 + $0x390] sm:$0xff]
    %v1403 = vld [vmem:[#allocation6 + $0x3b4] sm:$0xff]
    %v1404 = vld [vmem:[#allocation6 + $0x3bc] sm:$0xff]
    %v1405 = vld [vmem:[#allocation6 + $0x3e0] sm:$0xff]
    %v1406 = vld [vmem:[#allocation6 + $0x3e8] sm:$0xff]
    %v1407 = vld [vmem:[#allocation6 + $0x40c] sm:$0xff]
    %v1408 = vld [vmem:[#allocation6 + $0x414] sm:$0xff]
    %v1409 = vld [vmem:[#allocation6 + $0x438] sm:$0xff]
    %v1410 = vld [vmem:[#allocation6 + $0x440] sm:$0xff]
    %v1411 = vld [vmem:[#allocation6 + $0x464] sm:$0xff]
    %v1412 = vld [vmem:[#allocation6 + $0x46c] sm:$0xff]
    %v1413 = vld [vmem:[#allocation6 + $0x490] sm:$0xff]
    %v1414 = vld [vmem:[#allocation6 + $0x498] sm:$0xff]
    %v1415 = vld [vmem:[#allocation6 + $0x4bc] sm:$0xff]
    %v1416 = vld [vmem:[#allocation6 + $0x4c4] sm:$0xff]
    %v1417 = vld [vmem:[#allocation6 + $0x4e8] sm:$0xff]
    %v1418 = vld [vmem:[#allocation6 + $0x4f0] sm:$0xff]
    %v1419 = vld [vmem:[#allocation6 + $0x514] sm:$0xff]
    %v1420 = vld [vmem:[#allocation6 + $0x51c] sm:$0xff]
    %v1421 = vld [vmem:[#allocation6 + $0x540] sm:$0xff]
    %v1422 = vld [vmem:[#allocation6 + $0x548] sm:$0xff]
    %v1423 = vld [vmem:[#allocation6 + $0x56c] sm:$0xff]
    %v1424 = vld [vmem:[#allocation6 + $0x574] sm:$0xff]
    %v1425 = vld [vmem:[#allocation7 + $0xc] sm:$0xf]
    %v1427 = vperm.slane %v1425, 0
    %v1428 = vperm.slane %v1425, 1
    %v1429 = vperm.slane %v1425, 2
    %v1430 = vperm.slane %v1425, 3
    %v1499 = vunpack.c.l.b16 %v1361
    %v1500 = vunpack.c.h.b16 %v1361
    %v1501 = vunpack.c.l.b16 %v1362
    %v1502 = vunpack.c.h.b16 %v1362
    %v1503 = vunpack.c.l.b16 %v1363
    %v1504 = vunpack.c.h.b16 %v1363
    %v1505 = vunpack.c.l.b16 %v1364
    %v1506 = vunpack.c.h.b16 %v1364
    %v1507 = vunpack.c.l.b16 %v1365
    %v1508 = vunpack.c.h.b16 %v1365
    %v1509 = vunpack.c.l.b16 %v1366
    %v1510 = vunpack.c.h.b16 %v1366
    %v1511 = vunpack.c.l.b16 %v1367
    %v1512 = vunpack.c.h.b16 %v1367
    %v1513 = vunpack.c.l.b16 %v1368
    %v1514 = vunpack.c.h.b16 %v1368
    %v1515 = vunpack.c.l.b16 %v1369
    %v1516 = vunpack.c.h.b16 %v1369
    %v1517 = vunpack.c.l.b16 %v1370
    %v1518 = vunpack.c.h.b16 %v1370
    %v1519 = vunpack.c.l.b16 %v1371
    %v1520 = vunpack.c.h.b16 %v1371
    %v1521 = vunpack.c.l.b16 %v1372
    %v1522 = vunpack.c.h.b16 %v1372
    %v1523 = vunpack.c.l.b16 %v1373
    %v1524 = vunpack.c.h.b16 %v1373
    %v1525 = vunpack.c.l.b16 %v1374
    %v1526 = vunpack.c.h.b16 %v1374
    %v1527 = vunpack.c.l.b16 %v1375
    %v1528 = vunpack.c.h.b16 %v1375
    %v1529 = vunpack.c.l.b16 %v1376
    %v1530 = vunpack.c.h.b16 %v1376
    %v1531 = vunpack.c.l.b16 %v1377
    %v1532 = vunpack.c.h.b16 %v1377
    %v1533 = vunpack.c.l.b16 %v1378
    %v1534 = vunpack.c.h.b16 %v1378
    %v1535 = vunpack.c.l.b16 %v1379
    %v1536 = vunpack.c.h.b16 %v1379
    %v1537 = vunpack.c.l.b16 %v1380
    %v1538 = vunpack.c.h.b16 %v1380
    %v1539 = vunpack.c.l.b16 %v1381
    %v1540 = vunpack.c.h.b16 %v1381
    %v1541 = vunpack.c.l.b16 %v1382
    %v1542 = vunpack.c.h.b16 %v1382
    %v1543 = vunpack.c.l.b16 %v1383
    %v1544 = vunpack.c.h.b16 %v1383
    %v1545 = vunpack.c.l.b16 %v1384
    %v1546 = vunpack.c.h.b16 %v1384
    %v1547 = vunpack.c.l.b16 %v1385
    %v1548 = vunpack.c.h.b16 %v1385
    %v1549 = vunpack.c.l.b16 %v1386
    %v1550 = vunpack.c.h.b16 %v1386
    %v1551 = vunpack.c.l.b16 %v1387
    %v1552 = vunpack.c.h.b16 %v1387
    %v1553 = vunpack.c.l.b16 %v1388
    %v1554 = vunpack.c.h.b16 %v1388
    %v1555 = vunpack.c.l.b16 %v1389
    %v1556 = vunpack.c.h.b16 %v1389
    %v1557 = vunpack.c.l.b16 %v1390
    %v1558 = vunpack.c.h.b16 %v1390
    %v1559 = vunpack.c.l.b16 %v1391
    %v1560 = vunpack.c.h.b16 %v1391
    %v1561 = vunpack.c.l.b16 %v1392
    %v1562 = vunpack.c.h.b16 %v1392
    %v1563 = vunpack.c.l.b16 %v1393
    %v1564 = vunpack.c.h.b16 %v1393
    %v1565 = vunpack.c.l.b16 %v1394
    %v1566 = vunpack.c.h.b16 %v1394
    %v1567 = vunpack.c.l.b16 %v1395
    %v1568 = vunpack.c.h.b16 %v1395
    %v1569 = vunpack.c.l.b16 %v1396
    %v1570 = vunpack.c.h.b16 %v1396
    %v1571 = vunpack.c.l.b16 %v1397
    %v1572 = vunpack.c.h.b16 %v1397
    %v1573 = vunpack.c.l.b16 %v1398
    %v1574 = vunpack.c.h.b16 %v1398
    %v1575 = vunpack.c.l.b16 %v1399
    %v1576 = vunpack.c.h.b16 %v1399
    %v1577 = vunpack.c.l.b16 %v1400
    %v1578 = vunpack.c.h.b16 %v1400
    %v1579 = vunpack.c.l.b16 %v1401
    %v1580 = vunpack.c.h.b16 %v1401
    %v1581 = vunpack.c.l.b16 %v1402
    %v1582 = vunpack.c.h.b16 %v1402
    %v1583 = vunpack.c.l.b16 %v1403
    %v1584 = vunpack.c.h.b16 %v1403
    %v1585 = vunpack.c.l.b16 %v1404
    %v1586 = vunpack.c.h.b16 %v1404
    %v1587 = vunpack.c.l.b16 %v1405
    %v1588 = vunpack.c.h.b16 %v1405
    %v1589 = vunpack.c.l.b16 %v1406
    %v1590 = vunpack.c.h.b16 %v1406
    %v1591 = vunpack.c.l.b16 %v1407
    %v1592 = vunpack.c.h.b16 %v1407
    %v1593 = vunpack.c.l.b16 %v1408
    %v1594 = vunpack.c.h.b16 %v1408
    %v1595 = vunpack.c.l.b16 %v1409
    %v1596 = vunpack.c.h.b16 %v1409
    %v1597 = vunpack.c.l.b16 %v1410
    %v1598 = vunpack.c.h.b16 %v1410
    %v1599 = vunpack.c.l.b16 %v1411
    %v1600 = vunpack.c.h.b16 %v1411
    %v1601 = vunpack.c.l.b16 %v1412
    %v1602 = vunpack.c.h.b16 %v1412
    %v1603 = vunpack.c.l.b16 %v1413
    %v1604 = vunpack.c.h.b16 %v1413
    %v1605 = vunpack.c.l.b16 %v1414
    %v1606 = vunpack.c.h.b16 %v1414
    %v1607 = vunpack.c.l.b16 %v1415
    %v1608 = vunpack.c.h.b16 %v1415
    %v1609 = vunpack.c.l.b16 %v1416
    %v1610 = vunpack.c.h.b16 %v1416
    %v1611 = vunpack.c.l.b16 %v1417
    %v1612 = vunpack.c.h.b16 %v1417
    %v1613 = vunpack.c.l.b16 %v1418
    %v1614 = vunpack.c.h.b16 %v1418
    %v1615 = vunpack.c.l.b16 %v1419
    %v1616 = vunpack.c.h.b16 %v1419
    %v1617 = vunpack.c.l.b16 %v1420
    %v1618 = vunpack.c.h.b16 %v1420
    %v1619 = vunpack.c.l.b16 %v1421
    %v1620 = vunpack.c.h.b16 %v1421
    %v1621 = vunpack.c.l.b16 %v1422
    %v1622 = vunpack.c.h.b16 %v1422
    %v1623 = vunpack.c.l.b16 %v1423
    %v1624 = vunpack.c.h.b16 %v1423
    %v1625 = vunpack.c.l.b16 %v1424
    %v1626 = vunpack.c.h.b16 %v1424
    %v1627 = vpack.c.b16 %v1503, %v1499
    %v1628 = vpack.c.b16 %v1504, %v1500
    %v1629 = vpack.c.b16 %v1505, %v1501
    %v1630 = vpack.c.b16 %v1506, %v1502
    %v1631 = vpack.c.b16 %v1511, %v1507
    %v1632 = vpack.c.b16 %v1512, %v1508
    %v1633 = vpack.c.b16 %v1513, %v1509
    %v1634 = vpack.c.b16 %v1514, %v1510
    %v1635 = vpack.c.b16 %v1519, %v1515
    %v1636 = vpack.c.b16 %v1520, %v1516
    %v1637 = vpack.c.b16 %v1521, %v1517
    %v1638 = vpack.c.b16 %v1522, %v1518
    %v1639 = vpack.c.b16 %v1527, %v1523
    %v1640 = vpack.c.b16 %v1528, %v1524
    %v1641 = vpack.c.b16 %v1529, %v1525
    %v1642 = vpack.c.b16 %v1530, %v1526
    %v1643 = vpack.c.b16 %v1535, %v1531
    %v1644 = vpack.c.b16 %v1536, %v1532
    %v1645 = vpack.c.b16 %v1537, %v1533
    %v1646 = vpack.c.b16 %v1538, %v1534
    %v1647 = vpack.c.b16 %v1543, %v1539
    %v1648 = vpack.c.b16 %v1544, %v1540
    %v1649 = vpack.c.b16 %v1545, %v1541
    %v1650 = vpack.c.b16 %v1546, %v1542
    %v1651 = vpack.c.b16 %v1551, %v1547
    %v1652 = vpack.c.b16 %v1552, %v1548
    %v1653 = vpack.c.b16 %v1553, %v1549
    %v1654 = vpack.c.b16 %v1554, %v1550
    %v1655 = vpack.c.b16 %v1559, %v1555
    %v1656 = vpack.c.b16 %v1560, %v1556
    %v1657 = vpack.c.b16 %v1561, %v1557
    %v1658 = vpack.c.b16 %v1562, %v1558
    %v1659 = vpack.c.b16 %v1567, %v1563
    %v1660 = vpack.c.b16 %v1568, %v1564
    %v1661 = vpack.c.b16 %v1569, %v1565
    %v1662 = vpack.c.b16 %v1570, %v1566
    %v1663 = vpack.c.b16 %v1575, %v1571
    %v1664 = vpack.c.b16 %v1576, %v1572
    %v1665 = vpack.c.b16 %v1577, %v1573
    %v1666 = vpack.c.b16 %v1578, %v1574
    %v1667 = vpack.c.b16 %v1583, %v1579
    %v1668 = vpack.c.b16 %v1584, %v1580
    %v1669 = vpack.c.b16 %v1585, %v1581
    %v1670 = vpack.c.b16 %v1586, %v1582
    %v1671 = vpack.c.b16 %v1591, %v1587
    %v1672 = vpack.c.b16 %v1592, %v1588
    %v1673 = vpack.c.b16 %v1593, %v1589
    %v1674 = vpack.c.b16 %v1594, %v1590
    %v1675 = vpack.c.b16 %v1599, %v1595
    %v1676 = vpack.c.b16 %v1600, %v1596
    %v1677 = vpack.c.b16 %v1601, %v1597
    %v1678 = vpack.c.b16 %v1602, %v1598
    %v1679 = vpack.c.b16 %v1607, %v1603
    %v1680 = vpack.c.b16 %v1608, %v1604
    %v1681 = vpack.c.b16 %v1609, %v1605
    %v1682 = vpack.c.b16 %v1610, %v1606
    %v1683 = vpack.c.b16 %v1615, %v1611
    %v1684 = vpack.c.b16 %v1616, %v1612
    %v1685 = vpack.c.b16 %v1617, %v1613
    %v1686 = vpack.c.b16 %v1618, %v1614
    %v1687 = vpack.c.b16 %v1623, %v1619
    %v1688 = vpack.c.b16 %v1624, %v1620
    %v1689 = vpack.c.b16 %v1625, %v1621
    %v1690 = vpack.c.b16 %v1626, %v1622
    %1755 = vmatpush.bf16.msra.mxu0 %v1655
    %1756 = vmatpush.bf16.msra.mxu0 %v1651
    %1757 = vmatpush.bf16.msra.mxu0 %v1647
    %1758 = vmatpush.bf16.msra.mxu0 %v1643
    %1759 = vmatpush.bf16.msra.mxu0 %v1639
    %1760 = vmatpush.bf16.msra.mxu0 %v1635
    %1761 = vmatpush.bf16.msra.mxu0 %v1631
    %1762 = vmatpush.bf16.msra.mxu0 %v1627
    %1763 = vmatmul.bf16.gmra.mxu0 %v1359
    %v1764 = vpop.f32.mrf.mxu0
    %v1765 = vadd.f32 %v1427, %v1764
    %v1766 = vpop.f32.mrf.mxu0
    %v1767 = vadd.f32 %v1427, %v1766
    %1768 = vdwg.mxu0
    %1769 = vmatpush.bf16.msra.mxu0 %v1687
    %1770 = vmatpush.bf16.msra.mxu0 %v1683
    %1771 = vmatpush.bf16.msra.mxu0 %v1679
    %1772 = vmatpush.bf16.msra.mxu0 %v1675
    %1773 = vmatpush.bf16.msra.mxu0 %v1671
    %1774 = vmatpush.bf16.msra.mxu0 %v1667
    %1775 = vmatpush.bf16.msra.mxu0 %v1663
    %1776 = vmatpush.bf16.msra.mxu0 %v1659
    %1777 = vmatmul.bf16.gmra.mxu0 %v1360
    %v1778 = vpop.f32.mrf.mxu0
    %v1779 = vadd.f32 %v1765, %v1778
    %v1780 = vpop.f32.mrf.mxu0
    %v1781 = vadd.f32 %v1767, %v1780
    %1782 = vdwg.mxu0
    %1783 = vmatpush.bf16.msra.mxu0 %v1656
    %1784 = vmatpush.bf16.msra.mxu0 %v1652
    %1785 = vmatpush.bf16.msra.mxu0 %v1648
    %1786 = vmatpush.bf16.msra.mxu0 %v1644
    %1787 = vmatpush.bf16.msra.mxu0 %v1640
    %1788 = vmatpush.bf16.msra.mxu0 %v1636
    %1789 = vmatpush.bf16.msra.mxu0 %v1632
    %1790 = vmatpush.bf16.msra.mxu0 %v1628
    %1791 = vmatmul.bf16.gmra.mxu0 %v1359
    %v1792 = vpop.f32.mrf.mxu0
    %v1793 = vadd.f32 %v1428, %v1792
    %v1794 = vpop.f32.mrf.mxu0
    %v1795 = vadd.f32 %v1428, %v1794
    %1796 = vdwg.mxu0
    %1797 = vmatpush.bf16.msra.mxu0 %v1688
    %1798 = vmatpush.bf16.msra.mxu0 %v1684
    %1799 = vmatpush.bf16.msra.mxu0 %v1680
    %1800 = vmatpush.bf16.msra.mxu0 %v1676
    %1801 = vmatpush.bf16.msra.mxu0 %v1672
    %1802 = vmatpush.bf16.msra.mxu0 %v1668
    %1803 = vmatpush.bf16.msra.mxu0 %v1664
    %1804 = vmatpush.bf16.msra.mxu0 %v1660
    %1805 = vmatmul.bf16.gmra.mxu0 %v1360
    %v1806 = vpop.f32.mrf.mxu0
    %v1807 = vadd.f32 %v1793, %v1806
    %v1808 = vpop.f32.mrf.mxu0
    %v1809 = vadd.f32 %v1795, %v1808
    %1810 = vdwg.mxu0
    %1811 = vmatpush.bf16.msra.mxu0 %v1657
    %1812 = vmatpush.bf16.msra.mxu0 %v1653
    %1813 = vmatpush.bf16.msra.mxu0 %v1649
    %1814 = vmatpush.bf16.msra.mxu0 %v1645
    %1815 = vmatpush.bf16.msra.mxu0 %v1641
    %1816 = vmatpush.bf16.msra.mxu0 %v1637
    %1817 = vmatpush.bf16.msra.mxu0 %v1633
    %1818 = vmatpush.bf16.msra.mxu0 %v1629
    %1819 = vmatmul.bf16.gmra.mxu0 %v1359
    %v1820 = vpop.f32.mrf.mxu0
    %v1821 = vadd.f32 %v1429, %v1820
    %v1822 = vpop.f32.mrf.mxu0
    %v1823 = vadd.f32 %v1429, %v1822
    %1824 = vdwg.mxu0
    %1825 = vmatpush.bf16.msra.mxu0 %v1689
    %1826 = vmatpush.bf16.msra.mxu0 %v1685
    %1827 = vmatpush.bf16.msra.mxu0 %v1681
    %1828 = vmatpush.bf16.msra.mxu0 %v1677
    %1829 = vmatpush.bf16.msra.mxu0 %v1673
    %1830 = vmatpush.bf16.msra.mxu0 %v1669
    %1831 = vmatpush.bf16.msra.mxu0 %v1665
    %1832 = vmatpush.bf16.msra.mxu0 %v1661
    %1833 = vmatmul.bf16.gmra.mxu0 %v1360
    %v1834 = vpop.f32.mrf.mxu0
    %v1835 = vadd.f32 %v1821, %v1834
    %v1836 = vpop.f32.mrf.mxu0
    %v1837 = vadd.f32 %v1823, %v1836
    %1838 = vdwg.mxu0
    %1839 = vmatpush.bf16.msra.mxu0 %v1658
    %1840 = vmatpush.bf16.msra.mxu0 %v1654
    %1841 = vmatpush.bf16.msra.mxu0 %v1650
    %1842 = vmatpush.bf16.msra.mxu0 %v1646
    %1843 = vmatpush.bf16.msra.mxu0 %v1642
    %1844 = vmatpush.bf16.msra.mxu0 %v1638
    %1845 = vmatpush.bf16.msra.mxu0 %v1634
    %1846 = vmatpush.bf16.msra.mxu0 %v1630
    %1847 = vmatmul.bf16.gmra.mxu0 %v1359
    %v1848 = vpop.f32.mrf.mxu0
    %v1849 = vadd.f32 %v1430, %v1848
    %v1850 = vpop.f32.mrf.mxu0
    %v1851 = vadd.f32 %v1430, %v1850
    %1852 = vdwg.mxu0
    %1853 = vmatpush.bf16.msra.mxu0 %v1690
    %1854 = vmatpush.bf16.msra.mxu0 %v1686
    %1855 = vmatpush.bf16.msra.mxu0 %v1682
    %1856 = vmatpush.bf16.msra.mxu0 %v1678
    %1857 = vmatpush.bf16.msra.mxu0 %v1674
    %1858 = vmatpush.bf16.msra.mxu0 %v1670
    %1859 = vmatpush.bf16.msra.mxu0 %v1666
    %1860 = vmatpush.bf16.msra.mxu0 %v1662
    %1861 = vmatmul.bf16.gmra.mxu0 %v1360
    %v1862 = vpop.f32.mrf.mxu0
    %v1863 = vadd.f32 %v1849, %v1862
    %v1864 = vpop.f32.mrf.mxu0
    %v1865 = vadd.f32 %v1851, %v1864
    %1866 = vdwg.mxu0
    %v1867 = vld [vmem:[#allocation7 + $0x10] sm:$0xf]
    %v1868 = vld [vmem:[#allocation7 + $0x14] sm:$0xf]
    %v1869 = vadd.f32 %v1779, %v1807
    %v1870 = vadd.f32 %v1869, %v1835
    %v1871 = vadd.f32 %v1870, %v1863
    %1872 = vadd.xlane.f32.xlu0 %v1871
    %v1873 = vpop.xlane.xlu0 %1872
    %v1874 = vadd.f32 %v1781, %v1809
    %v1875 = vadd.f32 %v1874, %v1837
    %v1876 = vadd.f32 %v1875, %v1865
    %1877 = vadd.xlane.f32.xlu0 %v1876
    %v1878 = vpop.xlane.xlu0 %1877
    %v1879 = vrcp.pop 512.0
    %v1880 = vmul.f32 512.0, %v1879
    %v1881 = vsub.f32 1.0, %v1880
    %v1882 = vmul.f32 %v1879, %v1881
    %v1883 = vadd.f32 %v1879, %v1882
    %vm1884 = vweird.f32 %v1879
    %v1885 = vsel %vm1884, %v1879, %v1883
    %v1886 = vmul.f32 %v1873, %v1885
    %v1887 = vmul.f32 %v1878, %v1885
    %v1888 = vmul.f32 %v1779, %v1779
    %v1889 = vmul.f32 %v1807, %v1807
    %v1890 = vmul.f32 %v1835, %v1835
    %v1891 = vmul.f32 %v1863, %v1863
    %v1892 = vmul.f32 %v1781, %v1781
    %v1893 = vmul.f32 %v1809, %v1809
    %v1894 = vmul.f32 %v1837, %v1837
    %v1895 = vmul.f32 %v1865, %v1865
    %v1896 = vadd.f32 %v1888, %v1889
    %v1897 = vadd.f32 %v1896, %v1890
    %v1898 = vadd.f32 %v1897, %v1891
    %1899 = vadd.xlane.f32.xlu0 %v1898
    %v1900 = vpop.xlane.xlu0 %1899
    %v1901 = vadd.f32 %v1892, %v1893
    %v1902 = vadd.f32 %v1901, %v1894
    %v1903 = vadd.f32 %v1902, %v1895
    %1904 = vadd.xlane.f32.xlu0 %v1903
    %v1905 = vpop.xlane.xlu0 %1904
    %v1906 = vmul.f32 %v1900, %v1885
    %v1907 = vmul.f32 %v1905, %v1885
    %v1908 = vmul.f32 %v1886, %v1886
    %v1909 = vmul.f32 %v1887, %v1887
    %v1910 = vsub.f32 %v1906, %v1908
    %v1911 = vsub.f32 %v1907, %v1909
    %v1912 = vsub.f32 %v1779, %v1886
    %v1913 = vsub.f32 %v1807, %v1886
    %v1914 = vsub.f32 %v1835, %v1886
    %v1915 = vsub.f32 %v1863, %v1886
    %v1916 = vsub.f32 %v1781, %v1887
    %v1917 = vsub.f32 %v1809, %v1887
    %v1918 = vsub.f32 %v1837, %v1887
    %v1919 = vsub.f32 %v1865, %v1887
    %v1920 = vadd.f32 %v1910, 1e-05
    %v1921 = vadd.f32 %v1911, 1e-05
    %v1922 = vrsqrt.pop %v1920
    %v1923 = vmul.f32 %v1922, %v1920
    %v1924 = vmul.f32 %v1923, %v1922
    %v1925 = vmul.f32 0.5, %v1924
    %v1926 = vsub.f32 1.5, %v1925
    %v1927 = vmul.f32 %v1922, %v1926
    %vm1928 = vweird.f32 %v1920
    %vm1929 = vweird.f32 %v1922
    %vm1930 = vmor %vm1928, %vm1929
    %v1931 = vsel %vm1930, %v1922, %v1927
    %v1932 = vrsqrt.pop %v1921
    %v1933 = vmul.f32 %v1932, %v1921
    %v1934 = vmul.f32 %v1933, %v1932
    %v1935 = vmul.f32 0.5, %v1934
    %v1936 = vsub.f32 1.5, %v1935
    %v1937 = vmul.f32 %v1932, %v1936
    %vm1938 = vweird.f32 %v1921
    %vm1939 = vweird.f32 %v1932
    %vm1940 = vmor %vm1938, %vm1939
    %v1941 = vsel %vm1940, %v1932, %v1937
    %v1942 = vmul.f32 %v1912, %v1931
    %v1943 = vmul.f32 %v1913, %v1931
    %v1944 = vmul.f32 %v1914, %v1931
    %v1945 = vmul.f32 %v1915, %v1931
    %v1946 = vmul.f32 %v1916, %v1941
    %v1947 = vmul.f32 %v1917, %v1941
    %v1948 = vmul.f32 %v1918, %v1941
    %v1949 = vmul.f32 %v1919, %v1941
    %v1951 = vperm.slane %v1867, 0
    %v1952 = vperm.slane %v1867, 1
    %v1953 = vperm.slane %v1867, 2
    %v1954 = vperm.slane %v1867, 3
    %v1959 = vmul.f32 %v1942, %v1951
    %v1960 = vmul.f32 %v1943, %v1952
    %v1961 = vmul.f32 %v1944, %v1953
    %v1962 = vmul.f32 %v1945, %v1954
    %v1963 = vmul.f32 %v1946, %v1951
    %v1964 = vmul.f32 %v1947, %v1952
    %v1965 = vmul.f32 %v1948, %v1953
    %v1966 = vmul.f32 %v1949, %v1954
    %v1968 = vperm.slane %v1868, 0
    %v1969 = vperm.slane %v1868, 1
    %v1970 = vperm.slane %v1868, 2
    %v1971 = vperm.slane %v1868, 3
    %v1976 = vadd.f32 %v1959, %v1968
    %v1977 = vadd.f32 %v1960, %v1969
    %v1978 = vadd.f32 %v1961, %v1970
    %v1979 = vadd.f32 %v1962, %v1971
    %v1980 = vadd.f32 %v1963, %v1968
    %v1981 = vadd.f32 %v1964, %v1969
    %v1982 = vadd.f32 %v1965, %v1970
    %v1983 = vadd.f32 %v1966, %v1971
    %v1984 = vmax.f32 %v1976, 0.0
    %v1985 = vmax.f32 %v1977, 0.0
    %v1986 = vmax.f32 %v1978, 0.0
    %v1987 = vmax.f32 %v1979, 0.0
    %v1988 = vmax.f32 %v1980, 0.0
    %v1989 = vmax.f32 %v1981, 0.0
    %v1990 = vmax.f32 %v1982, 0.0
    %v1991 = vmax.f32 %v1983, 0.0
    %v1992 = vpack.c.bf16 %v1988, %v1984
    %v1993 = vpack.c.bf16 %v1989, %v1985
    %v1994 = vpack.c.bf16 %v1990, %v1986
    %v1995 = vpack.c.bf16 %v1991, %v1987
    %v1996 = vld [vmem:[#allocation4] sm:$0xff]
    %v1997 = vld [vmem:[#allocation4 + $0x8] sm:$0xff]
    %v1998 = vld [vmem:[#allocation4 + $0x10] sm:$0xff]
    %v1999 = vld [vmem:[#allocation4 + $0x18] sm:$0xff]
    %v2000 = vld [vmem:[#allocation4 + $0x20] sm:$0xff]
    %v2001 = vld [vmem:[#allocation4 + $0x28] sm:$0xff]
    %v2002 = vld [vmem:[#allocation4 + $0x30] sm:$0xff]
    %v2003 = vld [vmem:[#allocation4 + $0x38] sm:$0xff]
    %v2004 = vld [vmem:[#allocation4 + $0x40] sm:$0xff]
    %v2005 = vld [vmem:[#allocation4 + $0x48] sm:$0xff]
    %v2006 = vld [vmem:[#allocation4 + $0x50] sm:$0xff]
    %v2007 = vld [vmem:[#allocation4 + $0x58] sm:$0xff]
    %v2008 = vld [vmem:[#allocation4 + $0x60] sm:$0xff]
    %v2009 = vld [vmem:[#allocation4 + $0x68] sm:$0xff]
    %v2010 = vld [vmem:[#allocation4 + $0x70] sm:$0xff]
    %v2011 = vld [vmem:[#allocation4 + $0x78] sm:$0xff]
    %v2012 = vld [vmem:[#allocation4 + $0x80] sm:$0xff]
    %v2013 = vld [vmem:[#allocation4 + $0x88] sm:$0xff]
    %v2014 = vld [vmem:[#allocation4 + $0x90] sm:$0xff]
    %v2015 = vld [vmem:[#allocation4 + $0x98] sm:$0xff]
    %v2016 = vld [vmem:[#allocation4 + $0xa0] sm:$0xff]
    %v2017 = vld [vmem:[#allocation4 + $0xa8] sm:$0xff]
    %v2018 = vld [vmem:[#allocation4 + $0xb0] sm:$0xff]
    %v2019 = vld [vmem:[#allocation4 + $0xb8] sm:$0xff]
    %v2020 = vld [vmem:[#allocation4 + $0xc0] sm:$0xff]
    %v2021 = vld [vmem:[#allocation4 + $0xc8] sm:$0xff]
    %v2022 = vld [vmem:[#allocation4 + $0xd0] sm:$0xff]
    %v2023 = vld [vmem:[#allocation4 + $0xd8] sm:$0xff]
    %v2024 = vld [vmem:[#allocation4 + $0xe0] sm:$0xff]
    %v2025 = vld [vmem:[#allocation4 + $0xe8] sm:$0xff]
    %v2026 = vld [vmem:[#allocation4 + $0xf0] sm:$0xff]
    %v2027 = vld [vmem:[#allocation4 + $0xf8] sm:$0xff]
    %v2028 = vld [vmem:[#allocation4 + $0x100] sm:$0xff]
    %v2029 = vld [vmem:[#allocation4 + $0x108] sm:$0xff]
    %v2030 = vld [vmem:[#allocation4 + $0x110] sm:$0xff]
    %v2031 = vld [vmem:[#allocation4 + $0x118] sm:$0xff]
    %v2032 = vld [vmem:[#allocation4 + $0x120] sm:$0xff]
    %v2033 = vld [vmem:[#allocation4 + $0x128] sm:$0xff]
    %v2034 = vld [vmem:[#allocation4 + $0x130] sm:$0xff]
    %v2035 = vld [vmem:[#allocation4 + $0x138] sm:$0xff]
    %v2036 = vld [vmem:[#allocation4 + $0x140] sm:$0xff]
    %v2037 = vld [vmem:[#allocation4 + $0x148] sm:$0xff]
    %v2038 = vld [vmem:[#allocation4 + $0x150] sm:$0xff]
    %v2039 = vld [vmem:[#allocation4 + $0x158] sm:$0xff]
    %v2040 = vld [vmem:[#allocation4 + $0x160] sm:$0xff]
    %v2041 = vld [vmem:[#allocation4 + $0x168] sm:$0xff]
    %v2042 = vld [vmem:[#allocation4 + $0x170] sm:$0xff]
    %v2043 = vld [vmem:[#allocation4 + $0x178] sm:$0xff]
    %v2044 = vld [vmem:[#allocation4 + $0x180] sm:$0xff]
    %v2045 = vld [vmem:[#allocation4 + $0x188] sm:$0xff]
    %v2046 = vld [vmem:[#allocation4 + $0x190] sm:$0xff]
    %v2047 = vld [vmem:[#allocation4 + $0x198] sm:$0xff]
    %v2048 = vld [vmem:[#allocation4 + $0x1a0] sm:$0xff]
    %v2049 = vld [vmem:[#allocation4 + $0x1a8] sm:$0xff]
    %v2050 = vld [vmem:[#allocation4 + $0x1b0] sm:$0xff]
    %v2051 = vld [vmem:[#allocation4 + $0x1b8] sm:$0xff]
    %v2052 = vld [vmem:[#allocation4 + $0x1c0] sm:$0xff]
    %v2053 = vld [vmem:[#allocation4 + $0x1c8] sm:$0xff]
    %v2054 = vld [vmem:[#allocation4 + $0x1d0] sm:$0xff]
    %v2055 = vld [vmem:[#allocation4 + $0x1d8] sm:$0xff]
    %v2056 = vld [vmem:[#allocation4 + $0x1e0] sm:$0xff]
    %v2057 = vld [vmem:[#allocation4 + $0x1e8] sm:$0xff]
    %v2058 = vld [vmem:[#allocation4 + $0x1f0] sm:$0xff]
    %v2059 = vld [vmem:[#allocation4 + $0x1f8] sm:$0xff]
    %v2060 = vld [vmem:[#allocation7 + $0x18] sm:$0x3]
    %v2062 = vperm.slane %v2060, 0
    %v2063 = vperm.slane %v2060, 1
    %v2130 = vunpack.c.l.b16 %v1996
    %v2131 = vunpack.c.h.b16 %v1996
    %v2132 = vunpack.c.l.b16 %v1997
    %v2133 = vunpack.c.h.b16 %v1997
    %v2134 = vunpack.c.l.b16 %v1998
    %v2135 = vunpack.c.h.b16 %v1998
    %v2136 = vunpack.c.l.b16 %v1999
    %v2137 = vunpack.c.h.b16 %v1999
    %v2138 = vunpack.c.l.b16 %v2000
    %v2139 = vunpack.c.h.b16 %v2000
    %v2140 = vunpack.c.l.b16 %v2001
    %v2141 = vunpack.c.h.b16 %v2001
    %v2142 = vunpack.c.l.b16 %v2002
    %v2143 = vunpack.c.h.b16 %v2002
    %v2144 = vunpack.c.l.b16 %v2003
    %v2145 = vunpack.c.h.b16 %v2003
    %v2146 = vunpack.c.l.b16 %v2004
    %v2147 = vunpack.c.h.b16 %v2004
    %v2148 = vunpack.c.l.b16 %v2005
    %v2149 = vunpack.c.h.b16 %v2005
    %v2150 = vunpack.c.l.b16 %v2006
    %v2151 = vunpack.c.h.b16 %v2006
    %v2152 = vunpack.c.l.b16 %v2007
    %v2153 = vunpack.c.h.b16 %v2007
    %v2154 = vunpack.c.l.b16 %v2008
    %v2155 = vunpack.c.h.b16 %v2008
    %v2156 = vunpack.c.l.b16 %v2009
    %v2157 = vunpack.c.h.b16 %v2009
    %v2158 = vunpack.c.l.b16 %v2010
    %v2159 = vunpack.c.h.b16 %v2010
    %v2160 = vunpack.c.l.b16 %v2011
    %v2161 = vunpack.c.h.b16 %v2011
    %v2162 = vunpack.c.l.b16 %v2012
    %v2163 = vunpack.c.h.b16 %v2012
    %v2164 = vunpack.c.l.b16 %v2013
    %v2165 = vunpack.c.h.b16 %v2013
    %v2166 = vunpack.c.l.b16 %v2014
    %v2167 = vunpack.c.h.b16 %v2014
    %v2168 = vunpack.c.l.b16 %v2015
    %v2169 = vunpack.c.h.b16 %v2015
    %v2170 = vunpack.c.l.b16 %v2016
    %v2171 = vunpack.c.h.b16 %v2016
    %v2172 = vunpack.c.l.b16 %v2017
    %v2173 = vunpack.c.h.b16 %v2017
    %v2174 = vunpack.c.l.b16 %v2018
    %v2175 = vunpack.c.h.b16 %v2018
    %v2176 = vunpack.c.l.b16 %v2019
    %v2177 = vunpack.c.h.b16 %v2019
    %v2178 = vunpack.c.l.b16 %v2020
    %v2179 = vunpack.c.h.b16 %v2020
    %v2180 = vunpack.c.l.b16 %v2021
    %v2181 = vunpack.c.h.b16 %v2021
    %v2182 = vunpack.c.l.b16 %v2022
    %v2183 = vunpack.c.h.b16 %v2022
    %v2184 = vunpack.c.l.b16 %v2023
    %v2185 = vunpack.c.h.b16 %v2023
    %v2186 = vunpack.c.l.b16 %v2024
    %v2187 = vunpack.c.h.b16 %v2024
    %v2188 = vunpack.c.l.b16 %v2025
    %v2189 = vunpack.c.h.b16 %v2025
    %v2190 = vunpack.c.l.b16 %v2026
    %v2191 = vunpack.c.h.b16 %v2026
    %v2192 = vunpack.c.l.b16 %v2027
    %v2193 = vunpack.c.h.b16 %v2027
    %v2194 = vunpack.c.l.b16 %v2028
    %v2195 = vunpack.c.h.b16 %v2028
    %v2196 = vunpack.c.l.b16 %v2029
    %v2197 = vunpack.c.h.b16 %v2029
    %v2198 = vunpack.c.l.b16 %v2030
    %v2199 = vunpack.c.h.b16 %v2030
    %v2200 = vunpack.c.l.b16 %v2031
    %v2201 = vunpack.c.h.b16 %v2031
    %v2202 = vunpack.c.l.b16 %v2032
    %v2203 = vunpack.c.h.b16 %v2032
    %v2204 = vunpack.c.l.b16 %v2033
    %v2205 = vunpack.c.h.b16 %v2033
    %v2206 = vunpack.c.l.b16 %v2034
    %v2207 = vunpack.c.h.b16 %v2034
    %v2208 = vunpack.c.l.b16 %v2035
    %v2209 = vunpack.c.h.b16 %v2035
    %v2210 = vunpack.c.l.b16 %v2036
    %v2211 = vunpack.c.h.b16 %v2036
    %v2212 = vunpack.c.l.b16 %v2037
    %v2213 = vunpack.c.h.b16 %v2037
    %v2214 = vunpack.c.l.b16 %v2038
    %v2215 = vunpack.c.h.b16 %v2038
    %v2216 = vunpack.c.l.b16 %v2039
    %v2217 = vunpack.c.h.b16 %v2039
    %v2218 = vunpack.c.l.b16 %v2040
    %v2219 = vunpack.c.h.b16 %v2040
    %v2220 = vunpack.c.l.b16 %v2041
    %v2221 = vunpack.c.h.b16 %v2041
    %v2222 = vunpack.c.l.b16 %v2042
    %v2223 = vunpack.c.h.b16 %v2042
    %v2224 = vunpack.c.l.b16 %v2043
    %v2225 = vunpack.c.h.b16 %v2043
    %v2226 = vunpack.c.l.b16 %v2044
    %v2227 = vunpack.c.h.b16 %v2044
    %v2228 = vunpack.c.l.b16 %v2045
    %v2229 = vunpack.c.h.b16 %v2045
    %v2230 = vunpack.c.l.b16 %v2046
    %v2231 = vunpack.c.h.b16 %v2046
    %v2232 = vunpack.c.l.b16 %v2047
    %v2233 = vunpack.c.h.b16 %v2047
    %v2234 = vunpack.c.l.b16 %v2048
    %v2235 = vunpack.c.h.b16 %v2048
    %v2236 = vunpack.c.l.b16 %v2049
    %v2237 = vunpack.c.h.b16 %v2049
    %v2238 = vunpack.c.l.b16 %v2050
    %v2239 = vunpack.c.h.b16 %v2050
    %v2240 = vunpack.c.l.b16 %v2051
    %v2241 = vunpack.c.h.b16 %v2051
    %v2242 = vunpack.c.l.b16 %v2052
    %v2243 = vunpack.c.h.b16 %v2052
    %v2244 = vunpack.c.l.b16 %v2053
    %v2245 = vunpack.c.h.b16 %v2053
    %v2246 = vunpack.c.l.b16 %v2054
    %v2247 = vunpack.c.h.b16 %v2054
    %v2248 = vunpack.c.l.b16 %v2055
    %v2249 = vunpack.c.h.b16 %v2055
    %v2250 = vunpack.c.l.b16 %v2056
    %v2251 = vunpack.c.h.b16 %v2056
    %v2252 = vunpack.c.l.b16 %v2057
    %v2253 = vunpack.c.h.b16 %v2057
    %v2254 = vunpack.c.l.b16 %v2058
    %v2255 = vunpack.c.h.b16 %v2058
    %v2256 = vunpack.c.l.b16 %v2059
    %v2257 = vunpack.c.h.b16 %v2059
    %v2258 = vpack.c.b16 %v2132, %v2130
    %v2259 = vpack.c.b16 %v2133, %v2131
    %v2260 = vpack.c.b16 %v2136, %v2134
    %v2261 = vpack.c.b16 %v2137, %v2135
    %v2262 = vpack.c.b16 %v2140, %v2138
    %v2263 = vpack.c.b16 %v2141, %v2139
    %v2264 = vpack.c.b16 %v2144, %v2142
    %v2265 = vpack.c.b16 %v2145, %v2143
    %v2266 = vpack.c.b16 %v2148, %v2146
    %v2267 = vpack.c.b16 %v2149, %v2147
    %v2268 = vpack.c.b16 %v2152, %v2150
    %v2269 = vpack.c.b16 %v2153, %v2151
    %v2270 = vpack.c.b16 %v2156, %v2154
    %v2271 = vpack.c.b16 %v2157, %v2155
    %v2272 = vpack.c.b16 %v2160, %v2158
    %v2273 = vpack.c.b16 %v2161, %v2159
    %v2274 = vpack.c.b16 %v2164, %v2162
    %v2275 = vpack.c.b16 %v2165, %v2163
    %v2276 = vpack.c.b16 %v2168, %v2166
    %v2277 = vpack.c.b16 %v2169, %v2167
    %v2278 = vpack.c.b16 %v2172, %v2170
    %v2279 = vpack.c.b16 %v2173, %v2171
    %v2280 = vpack.c.b16 %v2176, %v2174
    %v2281 = vpack.c.b16 %v2177, %v2175
    %v2282 = vpack.c.b16 %v2180, %v2178
    %v2283 = vpack.c.b16 %v2181, %v2179
    %v2284 = vpack.c.b16 %v2184, %v2182
    %v2285 = vpack.c.b16 %v2185, %v2183
    %v2286 = vpack.c.b16 %v2188, %v2186
    %v2287 = vpack.c.b16 %v2189, %v2187
    %v2288 = vpack.c.b16 %v2192, %v2190
    %v2289 = vpack.c.b16 %v2193, %v2191
    %v2290 = vpack.c.b16 %v2196, %v2194
    %v2291 = vpack.c.b16 %v2197, %v2195
    %v2292 = vpack.c.b16 %v2200, %v2198
    %v2293 = vpack.c.b16 %v2201, %v2199
    %v2294 = vpack.c.b16 %v2204, %v2202
    %v2295 = vpack.c.b16 %v2205, %v2203
    %v2296 = vpack.c.b16 %v2208, %v2206
    %v2297 = vpack.c.b16 %v2209, %v2207
    %v2298 = vpack.c.b16 %v2212, %v2210
    %v2299 = vpack.c.b16 %v2213, %v2211
    %v2300 = vpack.c.b16 %v2216, %v2214
    %v2301 = vpack.c.b16 %v2217, %v2215
    %v2302 = vpack.c.b16 %v2220, %v2218
    %v2303 = vpack.c.b16 %v2221, %v2219
    %v2304 = vpack.c.b16 %v2224, %v2222
    %v2305 = vpack.c.b16 %v2225, %v2223
    %v2306 = vpack.c.b16 %v2228, %v2226
    %v2307 = vpack.c.b16 %v2229, %v2227
    %v2308 = vpack.c.b16 %v2232, %v2230
    %v2309 = vpack.c.b16 %v2233, %v2231
    %v2310 = vpack.c.b16 %v2236, %v2234
    %v2311 = vpack.c.b16 %v2237, %v2235
    %v2312 = vpack.c.b16 %v2240, %v2238
    %v2313 = vpack.c.b16 %v2241, %v2239
    %v2314 = vpack.c.b16 %v2244, %v2242
    %v2315 = vpack.c.b16 %v2245, %v2243
    %v2316 = vpack.c.b16 %v2248, %v2246
    %v2317 = vpack.c.b16 %v2249, %v2247
    %v2318 = vpack.c.b16 %v2252, %v2250
    %v2319 = vpack.c.b16 %v2253, %v2251
    %v2320 = vpack.c.b16 %v2256, %v2254
    %v2321 = vpack.c.b16 %v2257, %v2255
    %2386 = vmatpush.bf16.msra.mxu0 %v2272
    %2387 = vmatpush.bf16.msra.mxu0 %v2270
    %2388 = vmatpush.bf16.msra.mxu0 %v2268
    %2389 = vmatpush.bf16.msra.mxu0 %v2266
    %2390 = vmatpush.bf16.msra.mxu0 %v2264
    %2391 = vmatpush.bf16.msra.mxu0 %v2262
    %2392 = vmatpush.bf16.msra.mxu0 %v2260
    %2393 = vmatpush.bf16.msra.mxu0 %v2258
    %2394 = vmatmul.bf16.gmra.mxu0 %v1992
    %v2395 = vpop.f32.mrf.mxu0
    %v2396 = vadd.f32 %v2062, %v2395
    %v2397 = vpop.f32.mrf.mxu0
    %v2398 = vadd.f32 %v2062, %v2397
    %2399 = vdwg.mxu0
    %2400 = vmatpush.bf16.msra.mxu0 %v2288
    %2401 = vmatpush.bf16.msra.mxu0 %v2286
    %2402 = vmatpush.bf16.msra.mxu0 %v2284
    %2403 = vmatpush.bf16.msra.mxu0 %v2282
    %2404 = vmatpush.bf16.msra.mxu0 %v2280
    %2405 = vmatpush.bf16.msra.mxu0 %v2278
    %2406 = vmatpush.bf16.msra.mxu0 %v2276
    %2407 = vmatpush.bf16.msra.mxu0 %v2274
    %2408 = vmatmul.bf16.gmra.mxu0 %v1993
    %v2409 = vpop.f32.mrf.mxu0
    %v2410 = vadd.f32 %v2396, %v2409
    %v2411 = vpop.f32.mrf.mxu0
    %v2412 = vadd.f32 %v2398, %v2411
    %2413 = vdwg.mxu0
    %2414 = vmatpush.bf16.msra.mxu0 %v2304
    %2415 = vmatpush.bf16.msra.mxu0 %v2302
    %2416 = vmatpush.bf16.msra.mxu0 %v2300
    %2417 = vmatpush.bf16.msra.mxu0 %v2298
    %2418 = vmatpush.bf16.msra.mxu0 %v2296
    %2419 = vmatpush.bf16.msra.mxu0 %v2294
    %2420 = vmatpush.bf16.msra.mxu0 %v2292
    %2421 = vmatpush.bf16.msra.mxu0 %v2290
    %2422 = vmatmul.bf16.gmra.mxu0 %v1994
    %v2423 = vpop.f32.mrf.mxu0
    %v2424 = vadd.f32 %v2410, %v2423
    %v2425 = vpop.f32.mrf.mxu0
    %v2426 = vadd.f32 %v2412, %v2425
    %2427 = vdwg.mxu0
    %2428 = vmatpush.bf16.msra.mxu0 %v2320
    %2429 = vmatpush.bf16.msra.mxu0 %v2318
    %2430 = vmatpush.bf16.msra.mxu0 %v2316
    %2431 = vmatpush.bf16.msra.mxu0 %v2314
    %2432 = vmatpush.bf16.msra.mxu0 %v2312
    %2433 = vmatpush.bf16.msra.mxu0 %v2310
    %2434 = vmatpush.bf16.msra.mxu0 %v2308
    %2435 = vmatpush.bf16.msra.mxu0 %v2306
    %2436 = vmatmul.bf16.gmra.mxu0 %v1995
    %v2437 = vpop.f32.mrf.mxu0
    %v2438 = vadd.f32 %v2424, %v2437
    %v2439 = vpop.f32.mrf.mxu0
    %v2440 = vadd.f32 %v2426, %v2439
    %2441 = vdwg.mxu0
    %2442 = vmatpush.bf16.msra.mxu0 %v2273
    %2443 = vmatpush.bf16.msra.mxu0 %v2271
    %2444 = vmatpush.bf16.msra.mxu0 %v2269
    %2445 = vmatpush.bf16.msra.mxu0 %v2267
    %2446 = vmatpush.bf16.msra.mxu0 %v2265
    %2447 = vmatpush.bf16.msra.mxu0 %v2263
    %2448 = vmatpush.bf16.msra.mxu0 %v2261
    %2449 = vmatpush.bf16.msra.mxu0 %v2259
    %2450 = vmatmul.bf16.gmra.mxu0 %v1992
    %v2451 = vpop.f32.mrf.mxu0
    %v2452 = vadd.f32 %v2063, %v2451
    %v2453 = vpop.f32.mrf.mxu0
    %v2454 = vadd.f32 %v2063, %v2453
    %2455 = vdwg.mxu0
    %2456 = vmatpush.bf16.msra.mxu0 %v2289
    %2457 = vmatpush.bf16.msra.mxu0 %v2287
    %2458 = vmatpush.bf16.msra.mxu0 %v2285
    %2459 = vmatpush.bf16.msra.mxu0 %v2283
    %2460 = vmatpush.bf16.msra.mxu0 %v2281
    %2461 = vmatpush.bf16.msra.mxu0 %v2279
    %2462 = vmatpush.bf16.msra.mxu0 %v2277
    %2463 = vmatpush.bf16.msra.mxu0 %v2275
    %2464 = vmatmul.bf16.gmra.mxu0 %v1993
    %v2465 = vpop.f32.mrf.mxu0
    %v2466 = vadd.f32 %v2452, %v2465
    %v2467 = vpop.f32.mrf.mxu0
    %v2468 = vadd.f32 %v2454, %v2467
    %2469 = vdwg.mxu0
    %2470 = vmatpush.bf16.msra.mxu0 %v2305
    %2471 = vmatpush.bf16.msra.mxu0 %v2303
    %2472 = vmatpush.bf16.msra.mxu0 %v2301
    %2473 = vmatpush.bf16.msra.mxu0 %v2299
    %2474 = vmatpush.bf16.msra.mxu0 %v2297
    %2475 = vmatpush.bf16.msra.mxu0 %v2295
    %2476 = vmatpush.bf16.msra.mxu0 %v2293
    %2477 = vmatpush.bf16.msra.mxu0 %v2291
    %2478 = vmatmul.bf16.gmra.mxu0 %v1994
    %v2479 = vpop.f32.mrf.mxu0
    %v2480 = vadd.f32 %v2466, %v2479
    %v2481 = vpop.f32.mrf.mxu0
    %v2482 = vadd.f32 %v2468, %v2481
    %2483 = vdwg.mxu0
    %2484 = vmatpush.bf16.msra.mxu0 %v2321
    %2485 = vmatpush.bf16.msra.mxu0 %v2319
    %2486 = vmatpush.bf16.msra.mxu0 %v2317
    %2487 = vmatpush.bf16.msra.mxu0 %v2315
    %2488 = vmatpush.bf16.msra.mxu0 %v2313
    %2489 = vmatpush.bf16.msra.mxu0 %v2311
    %2490 = vmatpush.bf16.msra.mxu0 %v2309
    %2491 = vmatpush.bf16.msra.mxu0 %v2307
    %2492 = vmatmul.bf16.gmra.mxu0 %v1995
    %v2493 = vpop.f32.mrf.mxu0
    %v2494 = vadd.f32 %v2480, %v2493
    %v2495 = vpop.f32.mrf.mxu0
    %v2496 = vadd.f32 %v2482, %v2495
    %2497 = vdwg.mxu0
    %v2498 = vld [vmem:[#allocation7 + $0x1a] sm:$0x3]
    %v2499 = vld [vmem:[#allocation7 + $0x1c] sm:$0x3]
    %v2500 = vadd.f32 %v2438, %v2494
    %2501 = vadd.xlane.f32.xlu0 %v2500
    %v2502 = vpop.xlane.xlu0 %2501
    %v2503 = vadd.f32 %v2440, %v2496
    %2504 = vadd.xlane.f32.xlu0 %v2503
    %v2505 = vpop.xlane.xlu0 %2504
    %v2506 = vrcp.pop 256.0
    %v2507 = vmul.f32 256.0, %v2506
    %v2508 = vsub.f32 1.0, %v2507
    %v2509 = vmul.f32 %v2506, %v2508
    %v2510 = vadd.f32 %v2506, %v2509
    %vm2511 = vweird.f32 %v2506
    %v2512 = vsel %vm2511, %v2506, %v2510
    %v2513 = vmul.f32 %v2502, %v2512
    %v2514 = vmul.f32 %v2505, %v2512
    %v2515 = vmul.f32 %v2438, %v2438
    %v2516 = vmul.f32 %v2494, %v2494
    %v2517 = vmul.f32 %v2440, %v2440
    %v2518 = vmul.f32 %v2496, %v2496
    %v2519 = vadd.f32 %v2515, %v2516
    %2520 = vadd.xlane.f32.xlu0 %v2519
    %v2521 = vpop.xlane.xlu0 %2520
    %v2522 = vadd.f32 %v2517, %v2518
    %2523 = vadd.xlane.f32.xlu0 %v2522
    %v2524 = vpop.xlane.xlu0 %2523
    %v2525 = vmul.f32 %v2521, %v2512
    %v2526 = vmul.f32 %v2524, %v2512
    %v2527 = vmul.f32 %v2513, %v2513
    %v2528 = vmul.f32 %v2514, %v2514
    %v2529 = vsub.f32 %v2525, %v2527
    %v2530 = vsub.f32 %v2526, %v2528
    %v2531 = vsub.f32 %v2438, %v2513
    %v2532 = vsub.f32 %v2494, %v2513
    %v2533 = vsub.f32 %v2440, %v2514
    %v2534 = vsub.f32 %v2496, %v2514
    %v2535 = vadd.f32 %v2529, 1e-05
    %v2536 = vadd.f32 %v2530, 1e-05
    %v2537 = vrsqrt.pop %v2535
    %v2538 = vmul.f32 %v2537, %v2535
    %v2539 = vmul.f32 %v2538, %v2537
    %v2540 = vmul.f32 0.5, %v2539
    %v2541 = vsub.f32 1.5, %v2540
    %v2542 = vmul.f32 %v2537, %v2541
    %vm2543 = vweird.f32 %v2535
    %vm2544 = vweird.f32 %v2537
    %vm2545 = vmor %vm2543, %vm2544
    %v2546 = vsel %vm2545, %v2537, %v2542
    %v2547 = vrsqrt.pop %v2536
    %v2548 = vmul.f32 %v2547, %v2536
    %v2549 = vmul.f32 %v2548, %v2547
    %v2550 = vmul.f32 0.5, %v2549
    %v2551 = vsub.f32 1.5, %v2550
    %v2552 = vmul.f32 %v2547, %v2551
    %vm2553 = vweird.f32 %v2536
    %vm2554 = vweird.f32 %v2547
    %vm2555 = vmor %vm2553, %vm2554
    %v2556 = vsel %vm2555, %v2547, %v2552
    %v2557 = vmul.f32 %v2531, %v2546
    %v2558 = vmul.f32 %v2532, %v2546
    %v2559 = vmul.f32 %v2533, %v2556
    %v2560 = vmul.f32 %v2534, %v2556
    %v2562 = vperm.slane %v2498, 0
    %v2563 = vperm.slane %v2498, 1
    %v2566 = vmul.f32 %v2557, %v2562
    %v2567 = vmul.f32 %v2558, %v2563
    %v2568 = vmul.f32 %v2559, %v2562
    %v2569 = vmul.f32 %v2560, %v2563
    %v2571 = vperm.slane %v2499, 0
    %v2572 = vperm.slane %v2499, 1
    %v2575 = vadd.f32 %v2566, %v2571
    %v2576 = vadd.f32 %v2567, %v2572
    %v2577 = vadd.f32 %v2568, %v2571
    %v2578 = vadd.f32 %v2569, %v2572
    %v2579 = vmax.f32 %v2575, 0.0
    %v2580 = vmax.f32 %v2576, 0.0
    %v2581 = vmax.f32 %v2577, 0.0
    %v2582 = vmax.f32 %v2578, 0.0
    %v2583 = vpack.c.bf16 %v2581, %v2579
    %v2584 = vpack.c.bf16 %v2582, %v2580
    %v2585 = vld [vmem:[#allocation6 + $0x28] sm:$0xf]
    %v2586 = vld [vmem:[#allocation6 + $0x54] sm:$0xf]
    %v2587 = vld [vmem:[#allocation6 + $0x80] sm:$0xf]
    %v2588 = vld [vmem:[#allocation6 + $0xac] sm:$0xf]
    %v2589 = vld [vmem:[#allocation6 + $0xd8] sm:$0xf]
    %v2590 = vld [vmem:[#allocation6 + $0x104] sm:$0xf]
    %v2591 = vld [vmem:[#allocation6 + $0x130] sm:$0xf]
    %v2592 = vld [vmem:[#allocation6 + $0x15c] sm:$0xf]
    %v2593 = vld [vmem:[#allocation6 + $0x188] sm:$0xf]
    %v2594 = vld [vmem:[#allocation6 + $0x1b4] sm:$0xf]
    %v2595 = vld [vmem:[#allocation6 + $0x1e0] sm:$0xf]
    %v2596 = vld [vmem:[#allocation6 + $0x20c] sm:$0xf]
    %v2597 = vld [vmem:[#allocation6 + $0x238] sm:$0xf]
    %v2598 = vld [vmem:[#allocation6 + $0x264] sm:$0xf]
    %v2599 = vld [vmem:[#allocation6 + $0x290] sm:$0xf]
    %v2600 = vld [vmem:[#allocation6 + $0x2bc] sm:$0xf]
    %v2601 = vld [vmem:[#allocation6 + $0x2e8] sm:$0xf]
    %v2602 = vld [vmem:[#allocation6 + $0x314] sm:$0xf]
    %v2603 = vld [vmem:[#allocation6 + $0x340] sm:$0xf]
    %v2604 = vld [vmem:[#allocation6 + $0x36c] sm:$0xf]
    %v2605 = vld [vmem:[#allocation6 + $0x398] sm:$0xf]
    %v2606 = vld [vmem:[#allocation6 + $0x3c4] sm:$0xf]
    %v2607 = vld [vmem:[#allocation6 + $0x3f0] sm:$0xf]
    %v2608 = vld [vmem:[#allocation6 + $0x41c] sm:$0xf]
    %v2609 = vld [vmem:[#allocation6 + $0x448] sm:$0xf]
    %v2610 = vld [vmem:[#allocation6 + $0x474] sm:$0xf]
    %v2611 = vld [vmem:[#allocation6 + $0x4a0] sm:$0xf]
    %v2612 = vld [vmem:[#allocation6 + $0x4cc] sm:$0xf]
    %v2613 = vld [vmem:[#allocation6 + $0x4f8] sm:$0xf]
    %v2614 = vld [vmem:[#allocation6 + $0x524] sm:$0xf]
    %v2615 = vld [vmem:[#allocation6 + $0x550] sm:$0xf]
    %v2616 = vld [vmem:[#allocation6 + $0x57c] sm:$0xf]
    %v2617 = vld [vmem:[#allocation7 + $0x1e] sm:$0x1]
    %v2619 = vperm.slane %v2617, 0
    %v2653 = vunpack.c.l.b16 %v2585
    %v2654 = vunpack.c.l.b16 %v2586
    %v2655 = vunpack.c.l.b16 %v2587
    %v2656 = vunpack.c.l.b16 %v2588
    %v2657 = vunpack.c.l.b16 %v2589
    %v2658 = vunpack.c.l.b16 %v2590
    %v2659 = vunpack.c.l.b16 %v2591
    %v2660 = vunpack.c.l.b16 %v2592
    %v2661 = vunpack.c.l.b16 %v2593
    %v2662 = vunpack.c.l.b16 %v2594
    %v2663 = vunpack.c.l.b16 %v2595
    %v2664 = vunpack.c.l.b16 %v2596
    %v2665 = vunpack.c.l.b16 %v2597
    %v2666 = vunpack.c.l.b16 %v2598
    %v2667 = vunpack.c.l.b16 %v2599
    %v2668 = vunpack.c.l.b16 %v2600
    %v2669 = vunpack.c.l.b16 %v2601
    %v2670 = vunpack.c.l.b16 %v2602
    %v2671 = vunpack.c.l.b16 %v2603
    %v2672 = vunpack.c.l.b16 %v2604
    %v2673 = vunpack.c.l.b16 %v2605
    %v2674 = vunpack.c.l.b16 %v2606
    %v2675 = vunpack.c.l.b16 %v2607
    %v2676 = vunpack.c.l.b16 %v2608
    %v2677 = vunpack.c.l.b16 %v2609
    %v2678 = vunpack.c.l.b16 %v2610
    %v2679 = vunpack.c.l.b16 %v2611
    %v2680 = vunpack.c.l.b16 %v2612
    %v2681 = vunpack.c.l.b16 %v2613
    %v2682 = vunpack.c.l.b16 %v2614
    %v2683 = vunpack.c.l.b16 %v2615
    %v2684 = vunpack.c.l.b16 %v2616
    %v2685 = vpack.c.b16 %v2654, %v2653
    %v2686 = vpack.c.b16 %v2656, %v2655
    %v2687 = vpack.c.b16 %v2658, %v2657
    %v2688 = vpack.c.b16 %v2660, %v2659
    %v2689 = vpack.c.b16 %v2662, %v2661
    %v2690 = vpack.c.b16 %v2664, %v2663
    %v2691 = vpack.c.b16 %v2666, %v2665
    %v2692 = vpack.c.b16 %v2668, %v2667
    %v2693 = vpack.c.b16 %v2670, %v2669
    %v2694 = vpack.c.b16 %v2672, %v2671
    %v2695 = vpack.c.b16 %v2674, %v2673
    %v2696 = vpack.c.b16 %v2676, %v2675
    %v2697 = vpack.c.b16 %v2678, %v2677
    %v2698 = vpack.c.b16 %v2680, %v2679
    %v2699 = vpack.c.b16 %v2682, %v2681
    %v2700 = vpack.c.b16 %v2684, %v2683
    %2717 = vmatpush.bf16.msra.mxu0 %v2692
    %2718 = vmatpush.bf16.msra.mxu0 %v2691
    %2719 = vmatpush.bf16.msra.mxu0 %v2690
    %2720 = vmatpush.bf16.msra.mxu0 %v2689
    %2721 = vmatpush.bf16.msra.mxu0 %v2688
    %2722 = vmatpush.bf16.msra.mxu0 %v2687
    %2723 = vmatpush.bf16.msra.mxu0 %v2686
    %2724 = vmatpush.bf16.msra.mxu0 %v2685
    %2725 = vmatmul.bf16.gmra.mxu0 %v2583
    %v2726 = vpop.f32.mrf.mxu0
    %v2727 = vadd.f32 %v2619, %v2726
    %v2728 = vpop.f32.mrf.mxu0
    %v2729 = vadd.f32 %v2619, %v2728
    %2730 = vdwg.mxu0
    %2731 = vmatpush.bf16.msra.mxu0 %v2700
    %2732 = vmatpush.bf16.msra.mxu0 %v2699
    %2733 = vmatpush.bf16.msra.mxu0 %v2698
    %2734 = vmatpush.bf16.msra.mxu0 %v2697
    %2735 = vmatpush.bf16.msra.mxu0 %v2696
    %2736 = vmatpush.bf16.msra.mxu0 %v2695
    %2737 = vmatpush.bf16.msra.mxu0 %v2694
    %2738 = vmatpush.bf16.msra.mxu0 %v2693
    %2739 = vmatmul.bf16.gmra.mxu0 %v2584
    %v2740 = vpop.f32.mrf.mxu0
    %v2741 = vadd.f32 %v2727, %v2740
    %v2742 = vpop.f32.mrf.mxu0
    %v2743 = vadd.f32 %v2729, %v2742
    %2744 = vdwg.mxu0
    %v2745 = vld [vmem:[#allocation7 + $0x1f] sm:$0x1]
    %v2746 = vld [vmem:[#allocation7 + $0x20] sm:$0x1]
    %2747 = vadd.xlane.f32.xlu0 %v2741
    %v2748 = vpop.xlane.xlu0 %2747
    %2749 = vadd.xlane.f32.xlu0 %v2743
    %v2750 = vpop.xlane.xlu0 %2749
    %v2751 = vrcp.pop 128.0
    %v2752 = vmul.f32 128.0, %v2751
    %v2753 = vsub.f32 1.0, %v2752
    %v2754 = vmul.f32 %v2751, %v2753
    %v2755 = vadd.f32 %v2751, %v2754
    %vm2756 = vweird.f32 %v2751
    %v2757 = vsel %vm2756, %v2751, %v2755
    %v2758 = vmul.f32 %v2748, %v2757
    %v2759 = vmul.f32 %v2750, %v2757
    %v2760 = vmul.f32 %v2741, %v2741
    %v2761 = vmul.f32 %v2743, %v2743
    %2762 = vadd.xlane.f32.xlu0 %v2760
    %v2763 = vpop.xlane.xlu0 %2762
    %2764 = vadd.xlane.f32.xlu0 %v2761
    %v2765 = vpop.xlane.xlu0 %2764
    %v2766 = vmul.f32 %v2763, %v2757
    %v2767 = vmul.f32 %v2765, %v2757
    %v2768 = vmul.f32 %v2758, %v2758
    %v2769 = vmul.f32 %v2759, %v2759
    %v2770 = vsub.f32 %v2766, %v2768
    %v2771 = vsub.f32 %v2767, %v2769
    %v2772 = vsub.f32 %v2741, %v2758
    %v2773 = vsub.f32 %v2743, %v2759
    %v2774 = vadd.f32 %v2770, 1e-05
    %v2775 = vadd.f32 %v2771, 1e-05
    %v2776 = vrsqrt.pop %v2774
    %v2777 = vmul.f32 %v2776, %v2774
    %v2778 = vmul.f32 %v2777, %v2776
    %v2779 = vmul.f32 0.5, %v2778
    %v2780 = vsub.f32 1.5, %v2779
    %v2781 = vmul.f32 %v2776, %v2780
    %vm2782 = vweird.f32 %v2774
    %vm2783 = vweird.f32 %v2776
    %vm2784 = vmor %vm2782, %vm2783
    %v2785 = vsel %vm2784, %v2776, %v2781
    %v2786 = vrsqrt.pop %v2775
    %v2787 = vmul.f32 %v2786, %v2775
    %v2788 = vmul.f32 %v2787, %v2786
    %v2789 = vmul.f32 0.5, %v2788
    %v2790 = vsub.f32 1.5, %v2789
    %v2791 = vmul.f32 %v2786, %v2790
    %vm2792 = vweird.f32 %v2775
    %vm2793 = vweird.f32 %v2786
    %vm2794 = vmor %vm2792, %vm2793
    %v2795 = vsel %vm2794, %v2786, %v2791
    %v2796 = vmul.f32 %v2772, %v2785
    %v2797 = vmul.f32 %v2773, %v2795
    %v2799 = vperm.slane %v2745, 0
    %v2801 = vmul.f32 %v2796, %v2799
    %v2802 = vmul.f32 %v2797, %v2799
    %v2804 = vperm.slane %v2746, 0
    %v2806 = vadd.f32 %v2801, %v2804
    %v2807 = vadd.f32 %v2802, %v2804
    %v2808 = vmax.f32 %v2806, 0.0
    %v2809 = vmax.f32 %v2807, 0.0
    %v2810 = vld [vmem:[#allocation7 + $0x21] sm:$0x1]
    %v2812 = vperm.slane %v2810, 0
    %v2814 = vmul.f32 %v2808, %v2812
    %v2815 = vmul.f32 %v2809, %v2812
    %2816 = vadd.xlane.f32.xlu0 %v2814
    %v2817 = vpop.xlane.xlu0 %2816
    %2818 = vadd.xlane.f32.xlu0 %v2815
    %v2819 = vpop.xlane.xlu0 %2818
    %v2820 = vld [vmem:[#allocation7 + $0x22] sm:$0x1]
    %v2822 = vperm.slane %v2820, 0
    %v2824 = vadd.f32 %v2817, %v2822
    %v2825 = vadd.f32 %v2819, %v2822
    %2826 = vst [vmem:[%s5] sm:$0xff] %v2824
    %2827 = vst [vmem:[%s5 + $0x8] sm:$0xff] %v2825
    // Predicated region
    $region38: #{value_net_forward.1} parent=1 // pred_check
      _
    $region39: #{value_net_forward.1} parent=1 // pred_check_branch
      %2829 = sbr.rel (0) target = $region41
    $region40: #{value_net_forward.1} parent=1 // pred_region
      _
    $region41: #{value_net_forward.1} parent=1 // pred_fallthru
      _
    // Predicated region
    $region42: #{value_net_forward.1} parent=1 // pred_check
      _
    $region43: #{value_net_forward.1} parent=1 // pred_check_branch
      %2831 = sbr.rel (0) target = $region45
    $region44: #{value_net_forward.1} parent=1 // pred_region
      _
    $region45: #{value_net_forward.1} parent=1 // pred_fallthru
      _
    %2832 = vsyncpa [#allocation3], 1
    %2833 = vsyncpa [#allocation5], 1
    %2834 = vsyncpa [#allocation8], 1

</llo_original>
